<compile_context>
chip_gen: v5e
topology: v5e:2x2
jax: 0.10.0
libtpu: 0.0.40
codegen_flags: <defaults>
</compile_context>

<pallas_src>
import jax
import jax.numpy as jnp
from jax.experimental import pallas as pl
from jax.experimental.pallas import tpu as pltpu


# -----------------------------------------------------------------------------
# VMEM policy / time-tile selection
# -----------------------------------------------------------------------------
def _vmem_limit_bytes():
    """Generation-aware VMEM limit: physical capacity minus headroom, <=112MiB."""
    try:
        cap = pltpu.get_tpu_info().vmem_capacity_bytes
    except Exception:
        cap = 64 * 1024 * 1024          # conservative default (v7x per-TC size)
    return int(max(32 * 1024 * 1024, min(cap - 16 * 1024 * 1024,
                                         112 * 1024 * 1024)))


def _pick_t_block(T, B, H, vmem_limit):
    """Largest multiple-of-8 time tile whose double-buffered blocks fit a budget."""
    # Per time step: 2 directions x (gi (B,3H) bf16 + out (B,H) f32), x2 buffers.
    bytes_per_step = 2 * 2 * (B * 3 * H * 2 + B * H * 4)
    budget = vmem_limit // 2            # headroom for weights, carry, scratch
    tb = budget // max(bytes_per_step, 1)
    t_pad8 = ((T + 7) // 8) * 8
    tb = min(int(tb), 128, t_pad8)
    return max(8, (tb // 8) * 8)


# -----------------------------------------------------------------------------
# Pallas kernel: fused bidirectional GRU recurrence over precomputed input gates.
#   gi_f, gi_b : (t_block, B, 3H) bf16 time tiles (backward one pre-flipped)
#   wh         : (2, H, 3H) bf16  gate-stacked recurrent weights [r | z | n]
#   bhn        : (2, 1, H)  f32   recurrent bias of the n gate only
#   out_f/out_b: (t_block, B, H) f32 per-step hidden states (time-major)
# -----------------------------------------------------------------------------
def _make_fused_gru_kernel(hidden_size, t_block, unroll):
    H = hidden_size

    def kernel(gif_ref, gib_ref, wh_ref, bhn_ref, outf_ref, outb_ref, h_ref):
        @pl.when(pl.program_id(0) == 0)
        def _():
            h_ref[...] = jnp.zeros_like(h_ref)       # torch default h0 = 0

        wh_f = wh_ref[0]                  # (H, 3H) bf16, VMEM-resident
        wh_b = wh_ref[1]
        bhn_f = bhn_ref[0]                # (1, H) f32 — only b_hn lives in-kernel
        bhn_b = bhn_ref[1]

        def gates(gi_t, gh, bhn, h_prev):
            gi = gi_t.astype(jnp.float32)
            r = jax.nn.sigmoid(gi[:, 0 * H:1 * H] + gh[:, 0 * H:1 * H])
            z = jax.nn.sigmoid(gi[:, 1 * H:2 * H] + gh[:, 1 * H:2 * H])
            n = jnp.tanh(gi[:, 2 * H:3 * H] + r * (gh[:, 2 * H:3 * H] + bhn))
            return (1.0 - z) * n + z * h_prev

        def body(t, carry):
            hf, hb = carry                # (B, H) f32
            # Two independent chains per step: one direction's sigmoid/tanh and
            # gate VPU math hide under the other direction's MXU latency.
            ghf = jnp.dot(hf.astype(jnp.bfloat16), wh_f,
                          preferred_element_type=jnp.float32)
            ghb = jnp.dot(hb.astype(jnp.bfloat16), wh_b,
                          preferred_element_type=jnp.float32)
            hf = gates(gif_ref[t], ghf, bhn_f, hf)
            hb = gates(gib_ref[t], ghb, bhn_b, hb)
            outf_ref[t] = hf.astype(outf_ref.dtype)   # dense (B, H) store
            outb_ref[t] = hb.astype(outb_ref.dtype)
            return hf, hb

        hf, hb = jax.lax.fori_loop(0, t_block, body, (h_ref[0], h_ref[1]),
                                   unroll=unroll)
        h_ref[0] = hf
        h_ref[1] = hb

    return kernel


def _fused_gru_recurrence(gi_f, gi_b_rev, wh, bhn, *, t_block):
    """gi_*: (T_pad, B, 3H) bf16 time-major; wh: (2,H,3H) bf16; bhn: (2,1,H) f32."""
    T_pad, B, G = gi_f.shape
    H = G // 3
    assert T_pad % t_block == 0
    n_blocks = T_pad // t_block
    t_map = lambda i: (i, 0, 0)
    const_map = lambda i: (0, 0, 0)
    unroll = min(8, t_block)

    return pl.pallas_call(
        _make_fused_gru_kernel(H, t_block, unroll),
        out_shape=(jax.ShapeDtypeStruct((T_pad, B, H), jnp.float32),
                   jax.ShapeDtypeStruct((T_pad, B, H), jnp.float32)),
        grid_spec=pltpu.PrefetchScalarGridSpec(
            num_scalar_prefetch=0,
            grid=(n_blocks,),
            in_specs=[
                pl.BlockSpec((t_block, B, 3 * H), t_map),   # GI fwd (time tile)
                pl.BlockSpec((t_block, B, 3 * H), t_map),   # GI bwd (pre-flipped)
                pl.BlockSpec((2, H, 3 * H), const_map),     # W_hh, both dirs
                pl.BlockSpec((2, 1, H), const_map),         # b_hn, both dirs
            ],
            out_specs=[
                pl.BlockSpec((t_block, B, H), t_map),
                pl.BlockSpec((t_block, B, H), t_map),
            ],
            scratch_shapes=[pltpu.VMEM((2, B, H), jnp.float32)],  # h carry
        ),
        compiler_params=pltpu.CompilerParams(
            dimension_semantics=("arbitrary",),    # serial recurrence over time
            vmem_limit_bytes=_vmem_limit_bytes()),
    )(gi_f, gi_b_rev, wh, bhn)


# -----------------------------------------------------------------------------
# Wrapper (XLA side): embedding gather, hoisted input projection, layout prep.
# -----------------------------------------------------------------------------
def _prepare_recurrence_inputs(tokens, params):
    emb = params["embedding"][tokens]                 # (B, T, E) gather (XLA)
    B, T, E = emb.shape
    H = params["wh_f"].shape[0]

    def folded_bias(bi, bh):
        # b_hr / b_hz fold into the hoisted input bias; only b_hn stays in-kernel.
        return bi + jnp.concatenate(
            [bh[:, :2 * H], jnp.zeros((1, H), bh.dtype)], axis=-1)

    def input_proj(wi, bias):
        gi = jnp.dot(emb.reshape(B * T, E).astype(jnp.bfloat16),
                     wi.astype(jnp.bfloat16),
                     preferred_element_type=jnp.float32) + bias
        # time-major + bf16: halves the dominant HBM stream of the recurrence
        return gi.reshape(B, T, 3 * H).transpose(1, 0, 2).astype(jnp.bfloat16)

    gi_f = input_proj(params["wi_f"], folded_bias(params["bi_f"], params["bh_f"]))
    gi_b = input_proj(params["wi_b"], folded_bias(params["bi_b"], params["bh_b"]))
    gi_b_rev = jnp.flip(gi_b, axis=0)     # both directions iterate forward in-kernel

    wh = jnp.stack([params["wh_f"], params["wh_b"]], 0).astype(jnp.bfloat16)
    bhn = jnp.stack([params["bh_f"][:, 2 * H:], params["bh_b"][:, 2 * H:]], 0)
    return gi_f, gi_b_rev, wh, bhn


def encoder_rnn_forward(tokens, params):
    # NOTE: for production shapes use B a multiple of 8 (ideally >= 64) and H a
    # multiple of 128 so the (B,H)@(H,3H) step matmul fills the MXU and all
    # stores are unmasked; the demo shapes in __main__ are intentionally tiny.
    B, T = tokens.shape
    H = params["wh_f"].shape[0]
    gi_f, gi_b_rev, wh, bhn = _prepare_recurrence_inputs(tokens, params)

    t_block = _pick_t_block(T, B, H, _vmem_limit_bytes())
    T_pad = ((T + t_block - 1) // t_block) * t_block
    if T_pad != T:
        # Padding lands AFTER the real steps of both (forward-iterating) chains,
        # so the first T outputs are unaffected; padded outputs are sliced off.
        pad = ((0, T_pad - T), (0, 0), (0, 0))
        gi_f = jnp.pad(gi_f, pad)
        gi_b_rev = jnp.pad(gi_b_rev, pad)

    out_f, out_b_rev = _fused_gru_recurrence(gi_f, gi_b_rev, wh, bhn,
                                             t_block=t_block)
    out_f = out_f[:T]                     # (T, B, H) forward states, time order
    out_b_rev = out_b_rev[:T]             # backward states, reversed time order

    output = jnp.concatenate([out_f, jnp.flip(out_b_rev, axis=0)],
                             axis=-1).transpose(1, 0, 2)           # (B, T, 2H)
    hidden = jnp.stack([out_f[T - 1], out_b_rev[T - 1]], axis=0)   # (2, B, H)
    return output, hidden


# -----------------------------------------------------------------------------
# Pure-JAX scan reference (same bf16 gi / bf16 W_hh) for correctness checking.
# -----------------------------------------------------------------------------
def _gru_scan_reference(gi_tm, wh_d, bhn_d):
    T, B, G = gi_tm.shape
    H = G // 3

    def step(h, gi_t):
        gh = jnp.dot(h.astype(jnp.bfloat16), wh_d,
                     preferred_element_type=jnp.float32)
        gi = gi_t.astype(jnp.float32)
        r = jax.nn.sigmoid(gi[:, :H] + gh[:, :H])
        z = jax.nn.sigmoid(gi[:, H:2 * H] + gh[:, H:2 * H])
        n = jnp.tanh(gi[:, 2 * H:] + r * (gh[:, 2 * H:] + bhn_d))
        h_new = (1.0 - z) * n + z * h
        return h_new, h_new

    _, outs = jax.lax.scan(step, jnp.zeros((B, H), jnp.float32), gi_tm)
    return outs                            # (T, B, H)


def init_params(key, vocab_size, emb_size, hidden_size):
    ks = jax.random.split(key, 9)
    s = 1.0 / float(hidden_size) ** 0.5
    u = lambda k, shape: jax.random.uniform(k, shape, jnp.float32, -s, s)
    # Gate order on every stacked (., 3H) axis: [r | z | n] (torch convention).
    return dict(
        embedding=jax.random.normal(ks[0], (vocab_size, emb_size), jnp.float32),
        wi_f=u(ks[1], (emb_size, 3 * hidden_size)),
        wh_f=u(ks[2], (hidden_size, 3 * hidden_size)),
        bi_f=u(ks[3], (1, 3 * hidden_size)),
        bh_f=u(ks[4], (1, 3 * hidden_size)),
        wi_b=u(ks[5], (emb_size, 3 * hidden_size)),
        wh_b=u(ks[6], (hidden_size, 3 * hidden_size)),
        bi_b=u(ks[7], (1, 3 * hidden_size)),
        bh_b=u(ks[8], (1, 3 * hidden_size)),
    )


if __name__ == "__main__":
    B, T = 2, 8
    VOCAB, E, H = 20, 16, 32

    key = jax.random.PRNGKey(0)
    k_tok, k_par = jax.random.split(key)
    tokens = jax.random.randint(k_tok, (B, T), 0, VOCAB, dtype=jnp.int32)
    params = init_params(k_par, VOCAB, E, H)

    fwd = jax.jit(encoder_rnn_forward)
    output, hidden = jax.block_until_ready(fwd(tokens, params))
    assert output.shape == (B, T, 2 * H), output.shape
    assert hidden.shape == (2, B, H), hidden.shape

    # Cross-check the Pallas recurrence against a pure-JAX scan that consumes
    # exactly the same hoisted bf16 input-gate activations and bf16 weights.
    gi_f, gi_b_rev, wh, bhn = _prepare_recurrence_inputs(tokens, params)
    ref_f = _gru_scan_reference(gi_f, wh[0], bhn[0])          # (T, B, H)
    ref_b_rev = _gru_scan_reference(gi_b_rev, wh[1], bhn[1])  # reversed time order
    ref_out = jnp.concatenate([ref_f, jnp.flip(ref_b_rev, axis=0)],
                              axis=-1).transpose(1, 0, 2)
    ref_hid = jnp.stack([ref_f[T - 1], ref_b_rev[T - 1]], axis=0)

    # bf16 matmul inputs + MXU vs XLA accumulation order => small tolerance.
    assert jnp.allclose(output, ref_out, atol=5e-3, rtol=5e-3), (
        float(jnp.max(jnp.abs(output - ref_out))))
    assert jnp.allclose(hidden, ref_hid, atol=5e-3, rtol=5e-3), (
        float(jnp.max(jnp.abs(hidden - ref_hid))))

    print("KERNEL_OK")
</pallas_src>

<mosaic_0001>
module attributes {stable_mosaic.version = 11 : i64} {
  func.func @kernel(%arg0: i32, %arg1: memref<8x2x96xbf16, #tpu.memory_space<vmem>>, %arg2: memref<8x2x96xbf16, #tpu.memory_space<vmem>>, %arg3: memref<2x32x96xbf16, #tpu.memory_space<vmem>>, %arg4: memref<2x1x32xf32, #tpu.memory_space<vmem>>, %arg5: memref<8x2x32xf32, #tpu.memory_space<vmem>>, %arg6: memref<8x2x32xf32, #tpu.memory_space<vmem>>, %arg7: memref<2x2x32xf32, #tpu.memory_space<vmem>>) attributes {dimension_semantics = [#tpu.dimension_semantics<arbitrary>], iteration_bounds = array<i64: 1>, scalar_prefetch = 0 : i64, scratch_operands = 1 : i64, tpu.core_type = #tpu.core_type<tc>, window_params = [{transform_indices = @transform_0, window_bounds = array<i64: 8, 2, 96>}, {transform_indices = @transform_1, window_bounds = array<i64: 8, 2, 96>}, {pipeline_mode = #tpu.pipeline_mode<synchronous>, transform_indices = @transform_2, window_bounds = array<i64: 2, 32, 96>}, {pipeline_mode = #tpu.pipeline_mode<synchronous>, transform_indices = @transform_3, window_bounds = array<i64: 2, 1, 32>}, {transform_indices = @transform_4, window_bounds = array<i64: 8, 2, 32>}, {transform_indices = @transform_5, window_bounds = array<i64: 8, 2, 32>}]} {
    %c0_i32 = arith.constant 0 : i32
    %0 = arith.cmpi eq, %arg0, %c0_i32 : i32
    %1 = arith.extui %0 : i1 to i32
    %c0_i32_0 = arith.constant 0 : i32
    %2 = arith.cmpi ne, %1, %c0_i32_0 : i32
    scf.if %2 {
      %cst_151 = arith.constant 0.000000e+00 : f32
      %629 = vector.broadcast %cst_151 : f32 to vector<2x2x32xf32>
      %c0_152 = arith.constant 0 : index
      %c0_153 = arith.constant 0 : index
      %c0_154 = arith.constant 0 : index
      %630 = vector.load %arg7[%c0_152, %c0_153, %c0_154] : memref<2x2x32xf32, #tpu.memory_space<vmem>>, vector<2x2x32xf32>
      tpu.vector_store %arg7[%c0_152, %c0_153, %c0_154], %629 {strides = array<i32>} : memref<2x2x32xf32, #tpu.memory_space<vmem>>, vector<2x2x32xf32>,
    } else {
    }
    %c0 = arith.constant 0 : index
    %c0_1 = arith.constant 0 : index
    %c0_2 = arith.constant 0 : index
    %3 = vector.load %arg3[%c0, %c0_1, %c0_2] : memref<2x32x96xbf16, #tpu.memory_space<vmem>>, vector<1x32x96xbf16>
    %4 = vector.shape_cast %3 : vector<1x32x96xbf16> to vector<32x96xbf16>
    %c1 = arith.constant 1 : index
    %c0_3 = arith.constant 0 : index
    %c0_4 = arith.constant 0 : index
    %5 = vector.load %arg3[%c1, %c0_3, %c0_4] : memref<2x32x96xbf16, #tpu.memory_space<vmem>>, vector<1x32x96xbf16>
    %6 = vector.shape_cast %5 : vector<1x32x96xbf16> to vector<32x96xbf16>
    %c0_5 = arith.constant 0 : index
    %c0_6 = arith.constant 0 : index
    %c0_7 = arith.constant 0 : index
    %7 = vector.load %arg4[%c0_5, %c0_6, %c0_7] : memref<2x1x32xf32, #tpu.memory_space<vmem>>, vector<1x1x32xf32>
    %8 = vector.shape_cast %7 : vector<1x1x32xf32> to vector<1x32xf32>
    %c1_8 = arith.constant 1 : index
    %c0_9 = arith.constant 0 : index
    %c0_10 = arith.constant 0 : index
    %9 = vector.load %arg4[%c1_8, %c0_9, %c0_10] : memref<2x1x32xf32, #tpu.memory_space<vmem>>, vector<1x1x32xf32>
    %10 = vector.shape_cast %9 : vector<1x1x32xf32> to vector<1x32xf32>
    %c0_11 = arith.constant 0 : index
    %c0_12 = arith.constant 0 : index
    %c0_13 = arith.constant 0 : index
    %11 = vector.load %arg7[%c0_11, %c0_12, %c0_13] : memref<2x2x32xf32, #tpu.memory_space<vmem>>, vector<1x2x32xf32>
    %12 = vector.shape_cast %11 : vector<1x2x32xf32> to vector<2x32xf32>
    %c1_14 = arith.constant 1 : index
    %c0_15 = arith.constant 0 : index
    %c0_16 = arith.constant 0 : index
    %13 = vector.load %arg7[%c1_14, %c0_15, %c0_16] : memref<2x2x32xf32, #tpu.memory_space<vmem>>, vector<1x2x32xf32>
    %14 = vector.shape_cast %13 : vector<1x2x32xf32> to vector<2x32xf32>
    %c0_i32_17 = arith.constant 0 : i32
    %15 = arith.truncf %12 : vector<2x32xf32> to vector<2x32xbf16>
    %cst = arith.constant dense<0.000000e+00> : vector<2x96xf32>
    %16 = tpu.matmul %15, %4, %cst {dimension_numbers = #tpu.dot_dimension_numbers<[1], [0], [0], [1], [0, 0, 1, 1], [], []>} : vector<2x32xbf16>, vector<32x96xbf16>, vector<2x96xf32> -> vector<2x96xf32>
    %17 = arith.truncf %14 : vector<2x32xf32> to vector<2x32xbf16>
    %cst_18 = arith.constant dense<0.000000e+00> : vector<2x96xf32>
    %18 = tpu.matmul %17, %6, %cst_18 {dimension_numbers = #tpu.dot_dimension_numbers<[1], [0], [0], [1], [0, 0, 1, 1], [], []>} : vector<2x32xbf16>, vector<32x96xbf16>, vector<2x96xf32> -> vector<2x96xf32>
    %19 = arith.index_cast %c0_i32_17 : i32 to index
    %c0_19 = arith.constant 0 : index
    %c0_20 = arith.constant 0 : index
    %20 = vector.load %arg1[%19, %c0_19, %c0_20] : memref<8x2x96xbf16, #tpu.memory_space<vmem>>, vector<1x2x96xbf16>
    %21 = vector.shape_cast %20 : vector<1x2x96xbf16> to vector<2x96xbf16>
    %22 = arith.extf %21 : vector<2x96xbf16> to vector<2x96xf32>
    %23 = vector.extract_strided_slice %22 {offsets = [0, 0], sizes = [2, 32], strides = [1, 1]} : vector<2x96xf32> to vector<2x32xf32>
    %24 = vector.extract_strided_slice %16 {offsets = [0, 0], sizes = [2, 32], strides = [1, 1]} : vector<2x96xf32> to vector<2x32xf32>
    %25 = arith.addf %23, %24 : vector<2x32xf32>
    %26 = arith.negf %25 : vector<2x32xf32>
    %27 = math.exp %26 : vector<2x32xf32>
    %cst_21 = arith.constant 1.000000e+00 : f32
    %28 = vector.broadcast %cst_21 : f32 to vector<2x32xf32>
    %29 = arith.addf %28, %27 : vector<2x32xf32>
    %30 = arith.divf %28, %29 : vector<2x32xf32>
    %31 = vector.extract_strided_slice %22 {offsets = [0, 32], sizes = [2, 32], strides = [1, 1]} : vector<2x96xf32> to vector<2x32xf32>
    %32 = vector.extract_strided_slice %16 {offsets = [0, 32], sizes = [2, 32], strides = [1, 1]} : vector<2x96xf32> to vector<2x32xf32>
    %33 = arith.addf %31, %32 : vector<2x32xf32>
    %34 = arith.negf %33 : vector<2x32xf32>
    %35 = math.exp %34 : vector<2x32xf32>
    %cst_22 = arith.constant 1.000000e+00 : f32
    %36 = vector.broadcast %cst_22 : f32 to vector<2x32xf32>
    %37 = arith.addf %36, %35 : vector<2x32xf32>
    %38 = arith.divf %36, %37 : vector<2x32xf32>
    %39 = vector.extract_strided_slice %22 {offsets = [0, 64], sizes = [2, 32], strides = [1, 1]} : vector<2x96xf32> to vector<2x32xf32>
    %40 = vector.extract_strided_slice %16 {offsets = [0, 64], sizes = [2, 32], strides = [1, 1]} : vector<2x96xf32> to vector<2x32xf32>
    %41 = vector.broadcast %8 : vector<1x32xf32> to vector<2x32xf32>
    %42 = arith.addf %40, %41 : vector<2x32xf32>
    %43 = arith.mulf %30, %42 : vector<2x32xf32>
    %44 = arith.addf %39, %43 : vector<2x32xf32>
    %45 = math.tanh %44 : vector<2x32xf32>
    %cst_23 = arith.constant 1.000000e+00 : f32
    %46 = vector.broadcast %cst_23 : f32 to vector<2x32xf32>
    %47 = arith.subf %46, %38 : vector<2x32xf32>
    %48 = arith.mulf %47, %45 : vector<2x32xf32>
    %49 = arith.mulf %38, %12 : vector<2x32xf32>
    %50 = arith.addf %48, %49 : vector<2x32xf32>
    %51 = arith.index_cast %c0_i32_17 : i32 to index
    %c0_24 = arith.constant 0 : index
    %c0_25 = arith.constant 0 : index
    %52 = vector.load %arg2[%51, %c0_24, %c0_25] : memref<8x2x96xbf16, #tpu.memory_space<vmem>>, vector<1x2x96xbf16>
    %53 = vector.shape_cast %52 : vector<1x2x96xbf16> to vector<2x96xbf16>
    %54 = arith.extf %53 : vector<2x96xbf16> to vector<2x96xf32>
    %55 = vector.extract_strided_slice %54 {offsets = [0, 0], sizes = [2, 32], strides = [1, 1]} : vector<2x96xf32> to vector<2x32xf32>
    %56 = vector.extract_strided_slice %18 {offsets = [0, 0], sizes = [2, 32], strides = [1, 1]} : vector<2x96xf32> to vector<2x32xf32>
    %57 = arith.addf %55, %56 : vector<2x32xf32>
    %58 = arith.negf %57 : vector<2x32xf32>
    %59 = math.exp %58 : vector<2x32xf32>
    %cst_26 = arith.constant 1.000000e+00 : f32
    %60 = vector.broadcast %cst_26 : f32 to vector<2x32xf32>
    %61 = arith.addf %60, %59 : vector<2x32xf32>
    %62 = arith.divf %60, %61 : vector<2x32xf32>
    %63 = vector.extract_strided_slice %54 {offsets = [0, 32], sizes = [2, 32], strides = [1, 1]} : vector<2x96xf32> to vector<2x32xf32>
    %64 = vector.extract_strided_slice %18 {offsets = [0, 32], sizes = [2, 32], strides = [1, 1]} : vector<2x96xf32> to vector<2x32xf32>
    %65 = arith.addf %63, %64 : vector<2x32xf32>
    %66 = arith.negf %65 : vector<2x32xf32>
    %67 = math.exp %66 : vector<2x32xf32>
    %cst_27 = arith.constant 1.000000e+00 : f32
    %68 = vector.broadcast %cst_27 : f32 to vector<2x32xf32>
    %69 = arith.addf %68, %67 : vector<2x32xf32>
    %70 = arith.divf %68, %69 : vector<2x32xf32>
    %71 = vector.extract_strided_slice %54 {offsets = [0, 64], sizes = [2, 32], strides = [1, 1]} : vector<2x96xf32> to vector<2x32xf32>
    %72 = vector.extract_strided_slice %18 {offsets = [0, 64], sizes = [2, 32], strides = [1, 1]} : vector<2x96xf32> to vector<2x32xf32>
    %73 = vector.broadcast %10 : vector<1x32xf32> to vector<2x32xf32>
    %74 = arith.addf %72, %73 : vector<2x32xf32>
    %75 = arith.mulf %62, %74 : vector<2x32xf32>
    %76 = arith.addf %71, %75 : vector<2x32xf32>
    %77 = math.tanh %76 : vector<2x32xf32>
    %cst_28 = arith.constant 1.000000e+00 : f32
    %78 = vector.broadcast %cst_28 : f32 to vector<2x32xf32>
    %79 = arith.subf %78, %70 : vector<2x32xf32>
    %80 = arith.mulf %79, %77 : vector<2x32xf32>
    %81 = arith.mulf %70, %14 : vector<2x32xf32>
    %82 = arith.addf %80, %81 : vector<2x32xf32>
    %83 = arith.index_cast %c0_i32_17 : i32 to index
    %c0_29 = arith.constant 0 : index
    %c0_30 = arith.constant 0 : index
    %84 = vector.load %arg5[%83, %c0_29, %c0_30] : memref<8x2x32xf32, #tpu.memory_space<vmem>>, vector<1x2x32xf32>
    %85 = vector.shape_cast %84 : vector<1x2x32xf32> to vector<2x32xf32>
    %86 = vector.shape_cast %50 : vector<2x32xf32> to vector<1x2x32xf32>
    tpu.vector_store %arg5[%83, %c0_29, %c0_30], %86 {strides = array<i32>} : memref<8x2x32xf32, #tpu.memory_space<vmem>>, vector<1x2x32xf32>,
    %87 = arith.index_cast %c0_i32_17 : i32 to index
    %c0_31 = arith.constant 0 : index
    %c0_32 = arith.constant 0 : index
    %88 = vector.load %arg6[%87, %c0_31, %c0_32] : memref<8x2x32xf32, #tpu.memory_space<vmem>>, vector<1x2x32xf32>
    %89 = vector.shape_cast %88 : vector<1x2x32xf32> to vector<2x32xf32>
    %90 = vector.shape_cast %82 : vector<2x32xf32> to vector<1x2x32xf32>
    tpu.vector_store %arg6[%87, %c0_31, %c0_32], %90 {strides = array<i32>} : memref<8x2x32xf32, #tpu.memory_space<vmem>>, vector<1x2x32xf32>,
    %c1_i32 = arith.constant 1 : i32
    %91 = arith.truncf %50 : vector<2x32xf32> to vector<2x32xbf16>
    %cst_33 = arith.constant dense<0.000000e+00> : vector<2x96xf32>
    %92 = tpu.matmul %91, %4, %cst_33 {dimension_numbers = #tpu.dot_dimension_numbers<[1], [0], [0], [1], [0, 0, 1, 1], [], []>} : vector<2x32xbf16>, vector<32x96xbf16>, vector<2x96xf32> -> vector<2x96xf32>
    %93 = arith.truncf %82 : vector<2x32xf32> to vector<2x32xbf16>
    %cst_34 = arith.constant dense<0.000000e+00> : vector<2x96xf32>
    %94 = tpu.matmul %93, %6, %cst_34 {dimension_numbers = #tpu.dot_dimension_numbers<[1], [0], [0], [1], [0, 0, 1, 1], [], []>} : vector<2x32xbf16>, vector<32x96xbf16>, vector<2x96xf32> -> vector<2x96xf32>
    %95 = arith.index_cast %c1_i32 : i32 to index
    %c0_35 = arith.constant 0 : index
    %c0_36 = arith.constant 0 : index
    %96 = vector.load %arg1[%95, %c0_35, %c0_36] : memref<8x2x96xbf16, #tpu.memory_space<vmem>>, vector<1x2x96xbf16>
    %97 = vector.shape_cast %96 : vector<1x2x96xbf16> to vector<2x96xbf16>
    %98 = arith.extf %97 : vector<2x96xbf16> to vector<2x96xf32>
    %99 = vector.extract_strided_slice %98 {offsets = [0, 0], sizes = [2, 32], strides = [1, 1]} : vector<2x96xf32> to vector<2x32xf32>
    %100 = vector.extract_strided_slice %92 {offsets = [0, 0], sizes = [2, 32], strides = [1, 1]} : vector<2x96xf32> to vector<2x32xf32>
    %101 = arith.addf %99, %100 : vector<2x32xf32>
    %102 = arith.negf %101 : vector<2x32xf32>
    %103 = math.exp %102 : vector<2x32xf32>
    %cst_37 = arith.constant 1.000000e+00 : f32
    %104 = vector.broadcast %cst_37 : f32 to vector<2x32xf32>
    %105 = arith.addf %104, %103 : vector<2x32xf32>
    %106 = arith.divf %104, %105 : vector<2x32xf32>
    %107 = vector.extract_strided_slice %98 {offsets = [0, 32], sizes = [2, 32], strides = [1, 1]} : vector<2x96xf32> to vector<2x32xf32>
    %108 = vector.extract_strided_slice %92 {offsets = [0, 32], sizes = [2, 32], strides = [1, 1]} : vector<2x96xf32> to vector<2x32xf32>
    %109 = arith.addf %107, %108 : vector<2x32xf32>
    %110 = arith.negf %109 : vector<2x32xf32>
    %111 = math.exp %110 : vector<2x32xf32>
    %cst_38 = arith.constant 1.000000e+00 : f32
    %112 = vector.broadcast %cst_38 : f32 to vector<2x32xf32>
    %113 = arith.addf %112, %111 : vector<2x32xf32>
    %114 = arith.divf %112, %113 : vector<2x32xf32>
    %115 = vector.extract_strided_slice %98 {offsets = [0, 64], sizes = [2, 32], strides = [1, 1]} : vector<2x96xf32> to vector<2x32xf32>
    %116 = vector.extract_strided_slice %92 {offsets = [0, 64], sizes = [2, 32], strides = [1, 1]} : vector<2x96xf32> to vector<2x32xf32>
    %117 = vector.broadcast %8 : vector<1x32xf32> to vector<2x32xf32>
    %118 = arith.addf %116, %117 : vector<2x32xf32>
    %119 = arith.mulf %106, %118 : vector<2x32xf32>
    %120 = arith.addf %115, %119 : vector<2x32xf32>
    %121 = math.tanh %120 : vector<2x32xf32>
    %cst_39 = arith.constant 1.000000e+00 : f32
    %122 = vector.broadcast %cst_39 : f32 to vector<2x32xf32>
    %123 = arith.subf %122, %114 : vector<2x32xf32>
    %124 = arith.mulf %123, %121 : vector<2x32xf32>
    %125 = arith.mulf %114, %50 : vector<2x32xf32>
    %126 = arith.addf %124, %125 : vector<2x32xf32>
    %127 = arith.index_cast %c1_i32 : i32 to index
    %c0_40 = arith.constant 0 : index
    %c0_41 = arith.constant 0 : index
    %128 = vector.load %arg2[%127, %c0_40, %c0_41] : memref<8x2x96xbf16, #tpu.memory_space<vmem>>, vector<1x2x96xbf16>
    %129 = vector.shape_cast %128 : vector<1x2x96xbf16> to vector<2x96xbf16>
    %130 = arith.extf %129 : vector<2x96xbf16> to vector<2x96xf32>
    %131 = vector.extract_strided_slice %130 {offsets = [0, 0], sizes = [2, 32], strides = [1, 1]} : vector<2x96xf32> to vector<2x32xf32>
    %132 = vector.extract_strided_slice %94 {offsets = [0, 0], sizes = [2, 32], strides = [1, 1]} : vector<2x96xf32> to vector<2x32xf32>
    %133 = arith.addf %131, %132 : vector<2x32xf32>
    %134 = arith.negf %133 : vector<2x32xf32>
    %135 = math.exp %134 : vector<2x32xf32>
    %cst_42 = arith.constant 1.000000e+00 : f32
    %136 = vector.broadcast %cst_42 : f32 to vector<2x32xf32>
    %137 = arith.addf %136, %135 : vector<2x32xf32>
    %138 = arith.divf %136, %137 : vector<2x32xf32>
    %139 = vector.extract_strided_slice %130 {offsets = [0, 32], sizes = [2, 32], strides = [1, 1]} : vector<2x96xf32> to vector<2x32xf32>
    %140 = vector.extract_strided_slice %94 {offsets = [0, 32], sizes = [2, 32], strides = [1, 1]} : vector<2x96xf32> to vector<2x32xf32>
    %141 = arith.addf %139, %140 : vector<2x32xf32>
    %142 = arith.negf %141 : vector<2x32xf32>
    %143 = math.exp %142 : vector<2x32xf32>
    %cst_43 = arith.constant 1.000000e+00 : f32
    %144 = vector.broadcast %cst_43 : f32 to vector<2x32xf32>
    %145 = arith.addf %144, %143 : vector<2x32xf32>
    %146 = arith.divf %144, %145 : vector<2x32xf32>
    %147 = vector.extract_strided_slice %130 {offsets = [0, 64], sizes = [2, 32], strides = [1, 1]} : vector<2x96xf32> to vector<2x32xf32>
    %148 = vector.extract_strided_slice %94 {offsets = [0, 64], sizes = [2, 32], strides = [1, 1]} : vector<2x96xf32> to vector<2x32xf32>
    %149 = vector.broadcast %10 : vector<1x32xf32> to vector<2x32xf32>
    %150 = arith.addf %148, %149 : vector<2x32xf32>
    %151 = arith.mulf %138, %150 : vector<2x32xf32>
    %152 = arith.addf %147, %151 : vector<2x32xf32>
    %153 = math.tanh %152 : vector<2x32xf32>
    %cst_44 = arith.constant 1.000000e+00 : f32
    %154 = vector.broadcast %cst_44 : f32 to vector<2x32xf32>
    %155 = arith.subf %154, %146 : vector<2x32xf32>
    %156 = arith.mulf %155, %153 : vector<2x32xf32>
    %157 = arith.mulf %146, %82 : vector<2x32xf32>
    %158 = arith.addf %156, %157 : vector<2x32xf32>
    %159 = arith.index_cast %c1_i32 : i32 to index
    %c0_45 = arith.constant 0 : index
    %c0_46 = arith.constant 0 : index
    %160 = vector.load %arg5[%159, %c0_45, %c0_46] : memref<8x2x32xf32, #tpu.memory_space<vmem>>, vector<1x2x32xf32>
    %161 = vector.shape_cast %160 : vector<1x2x32xf32> to vector<2x32xf32>
    %162 = vector.shape_cast %126 : vector<2x32xf32> to vector<1x2x32xf32>
    tpu.vector_store %arg5[%159, %c0_45, %c0_46], %162 {strides = array<i32>} : memref<8x2x32xf32, #tpu.memory_space<vmem>>, vector<1x2x32xf32>,
    %163 = arith.index_cast %c1_i32 : i32 to index
    %c0_47 = arith.constant 0 : index
    %c0_48 = arith.constant 0 : index
    %164 = vector.load %arg6[%163, %c0_47, %c0_48] : memref<8x2x32xf32, #tpu.memory_space<vmem>>, vector<1x2x32xf32>
    %165 = vector.shape_cast %164 : vector<1x2x32xf32> to vector<2x32xf32>
    %166 = vector.shape_cast %158 : vector<2x32xf32> to vector<1x2x32xf32>
    tpu.vector_store %arg6[%163, %c0_47, %c0_48], %166 {strides = array<i32>} : memref<8x2x32xf32, #tpu.memory_space<vmem>>, vector<1x2x32xf32>,
    %c2_i32 = arith.constant 2 : i32
    %167 = arith.truncf %126 : vector<2x32xf32> to vector<2x32xbf16>
    %cst_49 = arith.constant dense<0.000000e+00> : vector<2x96xf32>
    %168 = tpu.matmul %167, %4, %cst_49 {dimension_numbers = #tpu.dot_dimension_numbers<[1], [0], [0], [1], [0, 0, 1, 1], [], []>} : vector<2x32xbf16>, vector<32x96xbf16>, vector<2x96xf32> -> vector<2x96xf32>
    %169 = arith.truncf %158 : vector<2x32xf32> to vector<2x32xbf16>
    %cst_50 = arith.constant dense<0.000000e+00> : vector<2x96xf32>
    %170 = tpu.matmul %169, %6, %cst_50 {dimension_numbers = #tpu.dot_dimension_numbers<[1], [0], [0], [1], [0, 0, 1, 1], [], []>} : vector<2x32xbf16>, vector<32x96xbf16>, vector<2x96xf32> -> vector<2x96xf32>
    %171 = arith.index_cast %c2_i32 : i32 to index
    %c0_51 = arith.constant 0 : index
    %c0_52 = arith.constant 0 : index
    %172 = vector.load %arg1[%171, %c0_51, %c0_52] : memref<8x2x96xbf16, #tpu.memory_space<vmem>>, vector<1x2x96xbf16>
    %173 = vector.shape_cast %172 : vector<1x2x96xbf16> to vector<2x96xbf16>
    %174 = arith.extf %173 : vector<2x96xbf16> to vector<2x96xf32>
    %175 = vector.extract_strided_slice %174 {offsets = [0, 0], sizes = [2, 32], strides = [1, 1]} : vector<2x96xf32> to vector<2x32xf32>
    %176 = vector.extract_strided_slice %168 {offsets = [0, 0], sizes = [2, 32], strides = [1, 1]} : vector<2x96xf32> to vector<2x32xf32>
    %177 = arith.addf %175, %176 : vector<2x32xf32>
    %178 = arith.negf %177 : vector<2x32xf32>
    %179 = math.exp %178 : vector<2x32xf32>
    %cst_53 = arith.constant 1.000000e+00 : f32
    %180 = vector.broadcast %cst_53 : f32 to vector<2x32xf32>
    %181 = arith.addf %180, %179 : vector<2x32xf32>
    %182 = arith.divf %180, %181 : vector<2x32xf32>
    %183 = vector.extract_strided_slice %174 {offsets = [0, 32], sizes = [2, 32], strides = [1, 1]} : vector<2x96xf32> to vector<2x32xf32>
    %184 = vector.extract_strided_slice %168 {offsets = [0, 32], sizes = [2, 32], strides = [1, 1]} : vector<2x96xf32> to vector<2x32xf32>
    %185 = arith.addf %183, %184 : vector<2x32xf32>
    %186 = arith.negf %185 : vector<2x32xf32>
    %187 = math.exp %186 : vector<2x32xf32>
    %cst_54 = arith.constant 1.000000e+00 : f32
    %188 = vector.broadcast %cst_54 : f32 to vector<2x32xf32>
    %189 = arith.addf %188, %187 : vector<2x32xf32>
    %190 = arith.divf %188, %189 : vector<2x32xf32>
    %191 = vector.extract_strided_slice %174 {offsets = [0, 64], sizes = [2, 32], strides = [1, 1]} : vector<2x96xf32> to vector<2x32xf32>
    %192 = vector.extract_strided_slice %168 {offsets = [0, 64], sizes = [2, 32], strides = [1, 1]} : vector<2x96xf32> to vector<2x32xf32>
    %193 = vector.broadcast %8 : vector<1x32xf32> to vector<2x32xf32>
    %194 = arith.addf %192, %193 : vector<2x32xf32>
    %195 = arith.mulf %182, %194 : vector<2x32xf32>
    %196 = arith.addf %191, %195 : vector<2x32xf32>
    %197 = math.tanh %196 : vector<2x32xf32>
    %cst_55 = arith.constant 1.000000e+00 : f32
    %198 = vector.broadcast %cst_55 : f32 to vector<2x32xf32>
    %199 = arith.subf %198, %190 : vector<2x32xf32>
    %200 = arith.mulf %199, %197 : vector<2x32xf32>
    %201 = arith.mulf %190, %126 : vector<2x32xf32>
    %202 = arith.addf %200, %201 : vector<2x32xf32>
    %203 = arith.index_cast %c2_i32 : i32 to index
    %c0_56 = arith.constant 0 : index
    %c0_57 = arith.constant 0 : index
    %204 = vector.load %arg2[%203, %c0_56, %c0_57] : memref<8x2x96xbf16, #tpu.memory_space<vmem>>, vector<1x2x96xbf16>
    %205 = vector.shape_cast %204 : vector<1x2x96xbf16> to vector<2x96xbf16>
    %206 = arith.extf %205 : vector<2x96xbf16> to vector<2x96xf32>
    %207 = vector.extract_strided_slice %206 {offsets = [0, 0], sizes = [2, 32], strides = [1, 1]} : vector<2x96xf32> to vector<2x32xf32>
    %208 = vector.extract_strided_slice %170 {offsets = [0, 0], sizes = [2, 32], strides = [1, 1]} : vector<2x96xf32> to vector<2x32xf32>
    %209 = arith.addf %207, %208 : vector<2x32xf32>
    %210 = arith.negf %209 : vector<2x32xf32>
    %211 = math.exp %210 : vector<2x32xf32>
    %cst_58 = arith.constant 1.000000e+00 : f32
    %212 = vector.broadcast %cst_58 : f32 to vector<2x32xf32>
    %213 = arith.addf %212, %211 : vector<2x32xf32>
    %214 = arith.divf %212, %213 : vector<2x32xf32>
    %215 = vector.extract_strided_slice %206 {offsets = [0, 32], sizes = [2, 32], strides = [1, 1]} : vector<2x96xf32> to vector<2x32xf32>
    %216 = vector.extract_strided_slice %170 {offsets = [0, 32], sizes = [2, 32], strides = [1, 1]} : vector<2x96xf32> to vector<2x32xf32>
    %217 = arith.addf %215, %216 : vector<2x32xf32>
    %218 = arith.negf %217 : vector<2x32xf32>
    %219 = math.exp %218 : vector<2x32xf32>
    %cst_59 = arith.constant 1.000000e+00 : f32
    %220 = vector.broadcast %cst_59 : f32 to vector<2x32xf32>
    %221 = arith.addf %220, %219 : vector<2x32xf32>
    %222 = arith.divf %220, %221 : vector<2x32xf32>
    %223 = vector.extract_strided_slice %206 {offsets = [0, 64], sizes = [2, 32], strides = [1, 1]} : vector<2x96xf32> to vector<2x32xf32>
    %224 = vector.extract_strided_slice %170 {offsets = [0, 64], sizes = [2, 32], strides = [1, 1]} : vector<2x96xf32> to vector<2x32xf32>
    %225 = vector.broadcast %10 : vector<1x32xf32> to vector<2x32xf32>
    %226 = arith.addf %224, %225 : vector<2x32xf32>
    %227 = arith.mulf %214, %226 : vector<2x32xf32>
    %228 = arith.addf %223, %227 : vector<2x32xf32>
    %229 = math.tanh %228 : vector<2x32xf32>
    %cst_60 = arith.constant 1.000000e+00 : f32
    %230 = vector.broadcast %cst_60 : f32 to vector<2x32xf32>
    %231 = arith.subf %230, %222 : vector<2x32xf32>
    %232 = arith.mulf %231, %229 : vector<2x32xf32>
    %233 = arith.mulf %222, %158 : vector<2x32xf32>
    %234 = arith.addf %232, %233 : vector<2x32xf32>
    %235 = arith.index_cast %c2_i32 : i32 to index
    %c0_61 = arith.constant 0 : index
    %c0_62 = arith.constant 0 : index
    %236 = vector.load %arg5[%235, %c0_61, %c0_62] : memref<8x2x32xf32, #tpu.memory_space<vmem>>, vector<1x2x32xf32>
    %237 = vector.shape_cast %236 : vector<1x2x32xf32> to vector<2x32xf32>
    %238 = vector.shape_cast %202 : vector<2x32xf32> to vector<1x2x32xf32>
    tpu.vector_store %arg5[%235, %c0_61, %c0_62], %238 {strides = array<i32>} : memref<8x2x32xf32, #tpu.memory_space<vmem>>, vector<1x2x32xf32>,
    %239 = arith.index_cast %c2_i32 : i32 to index
    %c0_63 = arith.constant 0 : index
    %c0_64 = arith.constant 0 : index
    %240 = vector.load %arg6[%239, %c0_63, %c0_64] : memref<8x2x32xf32, #tpu.memory_space<vmem>>, vector<1x2x32xf32>
    %241 = vector.shape_cast %240 : vector<1x2x32xf32> to vector<2x32xf32>
    %242 = vector.shape_cast %234 : vector<2x32xf32> to vector<1x2x32xf32>
    tpu.vector_store %arg6[%239, %c0_63, %c0_64], %242 {strides = array<i32>} : memref<8x2x32xf32, #tpu.memory_space<vmem>>, vector<1x2x32xf32>,
    %c3_i32 = arith.constant 3 : i32
    %243 = arith.truncf %202 : vector<2x32xf32> to vector<2x32xbf16>
    %cst_65 = arith.constant dense<0.000000e+00> : vector<2x96xf32>
    %244 = tpu.matmul %243, %4, %cst_65 {dimension_numbers = #tpu.dot_dimension_numbers<[1], [0], [0], [1], [0, 0, 1, 1], [], []>} : vector<2x32xbf16>, vector<32x96xbf16>, vector<2x96xf32> -> vector<2x96xf32>
    %245 = arith.truncf %234 : vector<2x32xf32> to vector<2x32xbf16>
    %cst_66 = arith.constant dense<0.000000e+00> : vector<2x96xf32>
    %246 = tpu.matmul %245, %6, %cst_66 {dimension_numbers = #tpu.dot_dimension_numbers<[1], [0], [0], [1], [0, 0, 1, 1], [], []>} : vector<2x32xbf16>, vector<32x96xbf16>, vector<2x96xf32> -> vector<2x96xf32>
    %247 = arith.index_cast %c3_i32 : i32 to index
    %c0_67 = arith.constant 0 : index
    %c0_68 = arith.constant 0 : index
    %248 = vector.load %arg1[%247, %c0_67, %c0_68] : memref<8x2x96xbf16, #tpu.memory_space<vmem>>, vector<1x2x96xbf16>
    %249 = vector.shape_cast %248 : vector<1x2x96xbf16> to vector<2x96xbf16>
    %250 = arith.extf %249 : vector<2x96xbf16> to vector<2x96xf32>
    %251 = vector.extract_strided_slice %250 {offsets = [0, 0], sizes = [2, 32], strides = [1, 1]} : vector<2x96xf32> to vector<2x32xf32>
    %252 = vector.extract_strided_slice %244 {offsets = [0, 0], sizes = [2, 32], strides = [1, 1]} : vector<2x96xf32> to vector<2x32xf32>
    %253 = arith.addf %251, %252 : vector<2x32xf32>
    %254 = arith.negf %253 : vector<2x32xf32>
    %255 = math.exp %254 : vector<2x32xf32>
    %cst_69 = arith.constant 1.000000e+00 : f32
    %256 = vector.broadcast %cst_69 : f32 to vector<2x32xf32>
    %257 = arith.addf %256, %255 : vector<2x32xf32>
    %258 = arith.divf %256, %257 : vector<2x32xf32>
    %259 = vector.extract_strided_slice %250 {offsets = [0, 32], sizes = [2, 32], strides = [1, 1]} : vector<2x96xf32> to vector<2x32xf32>
    %260 = vector.extract_strided_slice %244 {offsets = [0, 32], sizes = [2, 32], strides = [1, 1]} : vector<2x96xf32> to vector<2x32xf32>
    %261 = arith.addf %259, %260 : vector<2x32xf32>
    %262 = arith.negf %261 : vector<2x32xf32>
    %263 = math.exp %262 : vector<2x32xf32>
    %cst_70 = arith.constant 1.000000e+00 : f32
    %264 = vector.broadcast %cst_70 : f32 to vector<2x32xf32>
    %265 = arith.addf %264, %263 : vector<2x32xf32>
    %266 = arith.divf %264, %265 : vector<2x32xf32>
    %267 = vector.extract_strided_slice %250 {offsets = [0, 64], sizes = [2, 32], strides = [1, 1]} : vector<2x96xf32> to vector<2x32xf32>
    %268 = vector.extract_strided_slice %244 {offsets = [0, 64], sizes = [2, 32], strides = [1, 1]} : vector<2x96xf32> to vector<2x32xf32>
    %269 = vector.broadcast %8 : vector<1x32xf32> to vector<2x32xf32>
    %270 = arith.addf %268, %269 : vector<2x32xf32>
    %271 = arith.mulf %258, %270 : vector<2x32xf32>
    %272 = arith.addf %267, %271 : vector<2x32xf32>
    %273 = math.tanh %272 : vector<2x32xf32>
    %cst_71 = arith.constant 1.000000e+00 : f32
    %274 = vector.broadcast %cst_71 : f32 to vector<2x32xf32>
    %275 = arith.subf %274, %266 : vector<2x32xf32>
    %276 = arith.mulf %275, %273 : vector<2x32xf32>
    %277 = arith.mulf %266, %202 : vector<2x32xf32>
    %278 = arith.addf %276, %277 : vector<2x32xf32>
    %279 = arith.index_cast %c3_i32 : i32 to index
    %c0_72 = arith.constant 0 : index
    %c0_73 = arith.constant 0 : index
    %280 = vector.load %arg2[%279, %c0_72, %c0_73] : memref<8x2x96xbf16, #tpu.memory_space<vmem>>, vector<1x2x96xbf16>
    %281 = vector.shape_cast %280 : vector<1x2x96xbf16> to vector<2x96xbf16>
    %282 = arith.extf %281 : vector<2x96xbf16> to vector<2x96xf32>
    %283 = vector.extract_strided_slice %282 {offsets = [0, 0], sizes = [2, 32], strides = [1, 1]} : vector<2x96xf32> to vector<2x32xf32>
    %284 = vector.extract_strided_slice %246 {offsets = [0, 0], sizes = [2, 32], strides = [1, 1]} : vector<2x96xf32> to vector<2x32xf32>
    %285 = arith.addf %283, %284 : vector<2x32xf32>
    %286 = arith.negf %285 : vector<2x32xf32>
    %287 = math.exp %286 : vector<2x32xf32>
    %cst_74 = arith.constant 1.000000e+00 : f32
    %288 = vector.broadcast %cst_74 : f32 to vector<2x32xf32>
    %289 = arith.addf %288, %287 : vector<2x32xf32>
    %290 = arith.divf %288, %289 : vector<2x32xf32>
    %291 = vector.extract_strided_slice %282 {offsets = [0, 32], sizes = [2, 32], strides = [1, 1]} : vector<2x96xf32> to vector<2x32xf32>
    %292 = vector.extract_strided_slice %246 {offsets = [0, 32], sizes = [2, 32], strides = [1, 1]} : vector<2x96xf32> to vector<2x32xf32>
    %293 = arith.addf %291, %292 : vector<2x32xf32>
    %294 = arith.negf %293 : vector<2x32xf32>
    %295 = math.exp %294 : vector<2x32xf32>
    %cst_75 = arith.constant 1.000000e+00 : f32
    %296 = vector.broadcast %cst_75 : f32 to vector<2x32xf32>
    %297 = arith.addf %296, %295 : vector<2x32xf32>
    %298 = arith.divf %296, %297 : vector<2x32xf32>
    %299 = vector.extract_strided_slice %282 {offsets = [0, 64], sizes = [2, 32], strides = [1, 1]} : vector<2x96xf32> to vector<2x32xf32>
    %300 = vector.extract_strided_slice %246 {offsets = [0, 64], sizes = [2, 32], strides = [1, 1]} : vector<2x96xf32> to vector<2x32xf32>
    %301 = vector.broadcast %10 : vector<1x32xf32> to vector<2x32xf32>
    %302 = arith.addf %300, %301 : vector<2x32xf32>
    %303 = arith.mulf %290, %302 : vector<2x32xf32>
    %304 = arith.addf %299, %303 : vector<2x32xf32>
    %305 = math.tanh %304 : vector<2x32xf32>
    %cst_76 = arith.constant 1.000000e+00 : f32
    %306 = vector.broadcast %cst_76 : f32 to vector<2x32xf32>
    %307 = arith.subf %306, %298 : vector<2x32xf32>
    %308 = arith.mulf %307, %305 : vector<2x32xf32>
    %309 = arith.mulf %298, %234 : vector<2x32xf32>
    %310 = arith.addf %308, %309 : vector<2x32xf32>
    %311 = arith.index_cast %c3_i32 : i32 to index
    %c0_77 = arith.constant 0 : index
    %c0_78 = arith.constant 0 : index
    %312 = vector.load %arg5[%311, %c0_77, %c0_78] : memref<8x2x32xf32, #tpu.memory_space<vmem>>, vector<1x2x32xf32>
    %313 = vector.shape_cast %312 : vector<1x2x32xf32> to vector<2x32xf32>
    %314 = vector.shape_cast %278 : vector<2x32xf32> to vector<1x2x32xf32>
    tpu.vector_store %arg5[%311, %c0_77, %c0_78], %314 {strides = array<i32>} : memref<8x2x32xf32, #tpu.memory_space<vmem>>, vector<1x2x32xf32>,
    %315 = arith.index_cast %c3_i32 : i32 to index
    %c0_79 = arith.constant 0 : index
    %c0_80 = arith.constant 0 : index
    %316 = vector.load %arg6[%315, %c0_79, %c0_80] : memref<8x2x32xf32, #tpu.memory_space<vmem>>, vector<1x2x32xf32>
    %317 = vector.shape_cast %316 : vector<1x2x32xf32> to vector<2x32xf32>
    %318 = vector.shape_cast %310 : vector<2x32xf32> to vector<1x2x32xf32>
    tpu.vector_store %arg6[%315, %c0_79, %c0_80], %318 {strides = array<i32>} : memref<8x2x32xf32, #tpu.memory_space<vmem>>, vector<1x2x32xf32>,
    %c4_i32 = arith.constant 4 : i32
    %319 = arith.truncf %278 : vector<2x32xf32> to vector<2x32xbf16>
    %cst_81 = arith.constant dense<0.000000e+00> : vector<2x96xf32>
    %320 = tpu.matmul %319, %4, %cst_81 {dimension_numbers = #tpu.dot_dimension_numbers<[1], [0], [0], [1], [0, 0, 1, 1], [], []>} : vector<2x32xbf16>, vector<32x96xbf16>, vector<2x96xf32> -> vector<2x96xf32>
    %321 = arith.truncf %310 : vector<2x32xf32> to vector<2x32xbf16>
    %cst_82 = arith.constant dense<0.000000e+00> : vector<2x96xf32>
    %322 = tpu.matmul %321, %6, %cst_82 {dimension_numbers = #tpu.dot_dimension_numbers<[1], [0], [0], [1], [0, 0, 1, 1], [], []>} : vector<2x32xbf16>, vector<32x96xbf16>, vector<2x96xf32> -> vector<2x96xf32>
    %323 = arith.index_cast %c4_i32 : i32 to index
    %c0_83 = arith.constant 0 : index
    %c0_84 = arith.constant 0 : index
    %324 = vector.load %arg1[%323, %c0_83, %c0_84] : memref<8x2x96xbf16, #tpu.memory_space<vmem>>, vector<1x2x96xbf16>
    %325 = vector.shape_cast %324 : vector<1x2x96xbf16> to vector<2x96xbf16>
    %326 = arith.extf %325 : vector<2x96xbf16> to vector<2x96xf32>
    %327 = vector.extract_strided_slice %326 {offsets = [0, 0], sizes = [2, 32], strides = [1, 1]} : vector<2x96xf32> to vector<2x32xf32>
    %328 = vector.extract_strided_slice %320 {offsets = [0, 0], sizes = [2, 32], strides = [1, 1]} : vector<2x96xf32> to vector<2x32xf32>
    %329 = arith.addf %327, %328 : vector<2x32xf32>
    %330 = arith.negf %329 : vector<2x32xf32>
    %331 = math.exp %330 : vector<2x32xf32>
    %cst_85 = arith.constant 1.000000e+00 : f32
    %332 = vector.broadcast %cst_85 : f32 to vector<2x32xf32>
    %333 = arith.addf %332, %331 : vector<2x32xf32>
    %334 = arith.divf %332, %333 : vector<2x32xf32>
    %335 = vector.extract_strided_slice %326 {offsets = [0, 32], sizes = [2, 32], strides = [1, 1]} : vector<2x96xf32> to vector<2x32xf32>
    %336 = vector.extract_strided_slice %320 {offsets = [0, 32], sizes = [2, 32], strides = [1, 1]} : vector<2x96xf32> to vector<2x32xf32>
    %337 = arith.addf %335, %336 : vector<2x32xf32>
    %338 = arith.negf %337 : vector<2x32xf32>
    %339 = math.exp %338 : vector<2x32xf32>
    %cst_86 = arith.constant 1.000000e+00 : f32
    %340 = vector.broadcast %cst_86 : f32 to vector<2x32xf32>
    %341 = arith.addf %340, %339 : vector<2x32xf32>
    %342 = arith.divf %340, %341 : vector<2x32xf32>
    %343 = vector.extract_strided_slice %326 {offsets = [0, 64], sizes = [2, 32], strides = [1, 1]} : vector<2x96xf32> to vector<2x32xf32>
    %344 = vector.extract_strided_slice %320 {offsets = [0, 64], sizes = [2, 32], strides = [1, 1]} : vector<2x96xf32> to vector<2x32xf32>
    %345 = vector.broadcast %8 : vector<1x32xf32> to vector<2x32xf32>
    %346 = arith.addf %344, %345 : vector<2x32xf32>
    %347 = arith.mulf %334, %346 : vector<2x32xf32>
    %348 = arith.addf %343, %347 : vector<2x32xf32>
    %349 = math.tanh %348 : vector<2x32xf32>
    %cst_87 = arith.constant 1.000000e+00 : f32
    %350 = vector.broadcast %cst_87 : f32 to vector<2x32xf32>
    %351 = arith.subf %350, %342 : vector<2x32xf32>
    %352 = arith.mulf %351, %349 : vector<2x32xf32>
    %353 = arith.mulf %342, %278 : vector<2x32xf32>
    %354 = arith.addf %352, %353 : vector<2x32xf32>
    %355 = arith.index_cast %c4_i32 : i32 to index
    %c0_88 = arith.constant 0 : index
    %c0_89 = arith.constant 0 : index
    %356 = vector.load %arg2[%355, %c0_88, %c0_89] : memref<8x2x96xbf16, #tpu.memory_space<vmem>>, vector<1x2x96xbf16>
    %357 = vector.shape_cast %356 : vector<1x2x96xbf16> to vector<2x96xbf16>
    %358 = arith.extf %357 : vector<2x96xbf16> to vector<2x96xf32>
    %359 = vector.extract_strided_slice %358 {offsets = [0, 0], sizes = [2, 32], strides = [1, 1]} : vector<2x96xf32> to vector<2x32xf32>
    %360 = vector.extract_strided_slice %322 {offsets = [0, 0], sizes = [2, 32], strides = [1, 1]} : vector<2x96xf32> to vector<2x32xf32>
    %361 = arith.addf %359, %360 : vector<2x32xf32>
    %362 = arith.negf %361 : vector<2x32xf32>
    %363 = math.exp %362 : vector<2x32xf32>
    %cst_90 = arith.constant 1.000000e+00 : f32
    %364 = vector.broadcast %cst_90 : f32 to vector<2x32xf32>
    %365 = arith.addf %364, %363 : vector<2x32xf32>
    %366 = arith.divf %364, %365 : vector<2x32xf32>
    %367 = vector.extract_strided_slice %358 {offsets = [0, 32], sizes = [2, 32], strides = [1, 1]} : vector<2x96xf32> to vector<2x32xf32>
    %368 = vector.extract_strided_slice %322 {offsets = [0, 32], sizes = [2, 32], strides = [1, 1]} : vector<2x96xf32> to vector<2x32xf32>
    %369 = arith.addf %367, %368 : vector<2x32xf32>
    %370 = arith.negf %369 : vector<2x32xf32>
    %371 = math.exp %370 : vector<2x32xf32>
    %cst_91 = arith.constant 1.000000e+00 : f32
    %372 = vector.broadcast %cst_91 : f32 to vector<2x32xf32>
    %373 = arith.addf %372, %371 : vector<2x32xf32>
    %374 = arith.divf %372, %373 : vector<2x32xf32>
    %375 = vector.extract_strided_slice %358 {offsets = [0, 64], sizes = [2, 32], strides = [1, 1]} : vector<2x96xf32> to vector<2x32xf32>
    %376 = vector.extract_strided_slice %322 {offsets = [0, 64], sizes = [2, 32], strides = [1, 1]} : vector<2x96xf32> to vector<2x32xf32>
    %377 = vector.broadcast %10 : vector<1x32xf32> to vector<2x32xf32>
    %378 = arith.addf %376, %377 : vector<2x32xf32>
    %379 = arith.mulf %366, %378 : vector<2x32xf32>
    %380 = arith.addf %375, %379 : vector<2x32xf32>
    %381 = math.tanh %380 : vector<2x32xf32>
    %cst_92 = arith.constant 1.000000e+00 : f32
    %382 = vector.broadcast %cst_92 : f32 to vector<2x32xf32>
    %383 = arith.subf %382, %374 : vector<2x32xf32>
    %384 = arith.mulf %383, %381 : vector<2x32xf32>
    %385 = arith.mulf %374, %310 : vector<2x32xf32>
    %386 = arith.addf %384, %385 : vector<2x32xf32>
    %387 = arith.index_cast %c4_i32 : i32 to index
    %c0_93 = arith.constant 0 : index
    %c0_94 = arith.constant 0 : index
    %388 = vector.load %arg5[%387, %c0_93, %c0_94] : memref<8x2x32xf32, #tpu.memory_space<vmem>>, vector<1x2x32xf32>
    %389 = vector.shape_cast %388 : vector<1x2x32xf32> to vector<2x32xf32>
    %390 = vector.shape_cast %354 : vector<2x32xf32> to vector<1x2x32xf32>
    tpu.vector_store %arg5[%387, %c0_93, %c0_94], %390 {strides = array<i32>} : memref<8x2x32xf32, #tpu.memory_space<vmem>>, vector<1x2x32xf32>,
    %391 = arith.index_cast %c4_i32 : i32 to index
    %c0_95 = arith.constant 0 : index
    %c0_96 = arith.constant 0 : index
    %392 = vector.load %arg6[%391, %c0_95, %c0_96] : memref<8x2x32xf32, #tpu.memory_space<vmem>>, vector<1x2x32xf32>
    %393 = vector.shape_cast %392 : vector<1x2x32xf32> to vector<2x32xf32>
    %394 = vector.shape_cast %386 : vector<2x32xf32> to vector<1x2x32xf32>
    tpu.vector_store %arg6[%391, %c0_95, %c0_96], %394 {strides = array<i32>} : memref<8x2x32xf32, #tpu.memory_space<vmem>>, vector<1x2x32xf32>,
    %c5_i32 = arith.constant 5 : i32
    %395 = arith.truncf %354 : vector<2x32xf32> to vector<2x32xbf16>
    %cst_97 = arith.constant dense<0.000000e+00> : vector<2x96xf32>
    %396 = tpu.matmul %395, %4, %cst_97 {dimension_numbers = #tpu.dot_dimension_numbers<[1], [0], [0], [1], [0, 0, 1, 1], [], []>} : vector<2x32xbf16>, vector<32x96xbf16>, vector<2x96xf32> -> vector<2x96xf32>
    %397 = arith.truncf %386 : vector<2x32xf32> to vector<2x32xbf16>
    %cst_98 = arith.constant dense<0.000000e+00> : vector<2x96xf32>
    %398 = tpu.matmul %397, %6, %cst_98 {dimension_numbers = #tpu.dot_dimension_numbers<[1], [0], [0], [1], [0, 0, 1, 1], [], []>} : vector<2x32xbf16>, vector<32x96xbf16>, vector<2x96xf32> -> vector<2x96xf32>
    %399 = arith.index_cast %c5_i32 : i32 to index
    %c0_99 = arith.constant 0 : index
    %c0_100 = arith.constant 0 : index
    %400 = vector.load %arg1[%399, %c0_99, %c0_100] : memref<8x2x96xbf16, #tpu.memory_space<vmem>>, vector<1x2x96xbf16>
    %401 = vector.shape_cast %400 : vector<1x2x96xbf16> to vector<2x96xbf16>
    %402 = arith.extf %401 : vector<2x96xbf16> to vector<2x96xf32>
    %403 = vector.extract_strided_slice %402 {offsets = [0, 0], sizes = [2, 32], strides = [1, 1]} : vector<2x96xf32> to vector<2x32xf32>
    %404 = vector.extract_strided_slice %396 {offsets = [0, 0], sizes = [2, 32], strides = [1, 1]} : vector<2x96xf32> to vector<2x32xf32>
    %405 = arith.addf %403, %404 : vector<2x32xf32>
    %406 = arith.negf %405 : vector<2x32xf32>
    %407 = math.exp %406 : vector<2x32xf32>
    %cst_101 = arith.constant 1.000000e+00 : f32
    %408 = vector.broadcast %cst_101 : f32 to vector<2x32xf32>
    %409 = arith.addf %408, %407 : vector<2x32xf32>
    %410 = arith.divf %408, %409 : vector<2x32xf32>
    %411 = vector.extract_strided_slice %402 {offsets = [0, 32], sizes = [2, 32], strides = [1, 1]} : vector<2x96xf32> to vector<2x32xf32>
    %412 = vector.extract_strided_slice %396 {offsets = [0, 32], sizes = [2, 32], strides = [1, 1]} : vector<2x96xf32> to vector<2x32xf32>
    %413 = arith.addf %411, %412 : vector<2x32xf32>
    %414 = arith.negf %413 : vector<2x32xf32>
    %415 = math.exp %414 : vector<2x32xf32>
    %cst_102 = arith.constant 1.000000e+00 : f32
    %416 = vector.broadcast %cst_102 : f32 to vector<2x32xf32>
    %417 = arith.addf %416, %415 : vector<2x32xf32>
    %418 = arith.divf %416, %417 : vector<2x32xf32>
    %419 = vector.extract_strided_slice %402 {offsets = [0, 64], sizes = [2, 32], strides = [1, 1]} : vector<2x96xf32> to vector<2x32xf32>
    %420 = vector.extract_strided_slice %396 {offsets = [0, 64], sizes = [2, 32], strides = [1, 1]} : vector<2x96xf32> to vector<2x32xf32>
    %421 = vector.broadcast %8 : vector<1x32xf32> to vector<2x32xf32>
    %422 = arith.addf %420, %421 : vector<2x32xf32>
    %423 = arith.mulf %410, %422 : vector<2x32xf32>
    %424 = arith.addf %419, %423 : vector<2x32xf32>
    %425 = math.tanh %424 : vector<2x32xf32>
    %cst_103 = arith.constant 1.000000e+00 : f32
    %426 = vector.broadcast %cst_103 : f32 to vector<2x32xf32>
    %427 = arith.subf %426, %418 : vector<2x32xf32>
    %428 = arith.mulf %427, %425 : vector<2x32xf32>
    %429 = arith.mulf %418, %354 : vector<2x32xf32>
    %430 = arith.addf %428, %429 : vector<2x32xf32>
    %431 = arith.index_cast %c5_i32 : i32 to index
    %c0_104 = arith.constant 0 : index
    %c0_105 = arith.constant 0 : index
    %432 = vector.load %arg2[%431, %c0_104, %c0_105] : memref<8x2x96xbf16, #tpu.memory_space<vmem>>, vector<1x2x96xbf16>
    %433 = vector.shape_cast %432 : vector<1x2x96xbf16> to vector<2x96xbf16>
    %434 = arith.extf %433 : vector<2x96xbf16> to vector<2x96xf32>
    %435 = vector.extract_strided_slice %434 {offsets = [0, 0], sizes = [2, 32], strides = [1, 1]} : vector<2x96xf32> to vector<2x32xf32>
    %436 = vector.extract_strided_slice %398 {offsets = [0, 0], sizes = [2, 32], strides = [1, 1]} : vector<2x96xf32> to vector<2x32xf32>
    %437 = arith.addf %435, %436 : vector<2x32xf32>
    %438 = arith.negf %437 : vector<2x32xf32>
    %439 = math.exp %438 : vector<2x32xf32>
    %cst_106 = arith.constant 1.000000e+00 : f32
    %440 = vector.broadcast %cst_106 : f32 to vector<2x32xf32>
    %441 = arith.addf %440, %439 : vector<2x32xf32>
    %442 = arith.divf %440, %441 : vector<2x32xf32>
    %443 = vector.extract_strided_slice %434 {offsets = [0, 32], sizes = [2, 32], strides = [1, 1]} : vector<2x96xf32> to vector<2x32xf32>
    %444 = vector.extract_strided_slice %398 {offsets = [0, 32], sizes = [2, 32], strides = [1, 1]} : vector<2x96xf32> to vector<2x32xf32>
    %445 = arith.addf %443, %444 : vector<2x32xf32>
    %446 = arith.negf %445 : vector<2x32xf32>
    %447 = math.exp %446 : vector<2x32xf32>
    %cst_107 = arith.constant 1.000000e+00 : f32
    %448 = vector.broadcast %cst_107 : f32 to vector<2x32xf32>
    %449 = arith.addf %448, %447 : vector<2x32xf32>
    %450 = arith.divf %448, %449 : vector<2x32xf32>
    %451 = vector.extract_strided_slice %434 {offsets = [0, 64], sizes = [2, 32], strides = [1, 1]} : vector<2x96xf32> to vector<2x32xf32>
    %452 = vector.extract_strided_slice %398 {offsets = [0, 64], sizes = [2, 32], strides = [1, 1]} : vector<2x96xf32> to vector<2x32xf32>
    %453 = vector.broadcast %10 : vector<1x32xf32> to vector<2x32xf32>
    %454 = arith.addf %452, %453 : vector<2x32xf32>
    %455 = arith.mulf %442, %454 : vector<2x32xf32>
    %456 = arith.addf %451, %455 : vector<2x32xf32>
    %457 = math.tanh %456 : vector<2x32xf32>
    %cst_108 = arith.constant 1.000000e+00 : f32
    %458 = vector.broadcast %cst_108 : f32 to vector<2x32xf32>
    %459 = arith.subf %458, %450 : vector<2x32xf32>
    %460 = arith.mulf %459, %457 : vector<2x32xf32>
    %461 = arith.mulf %450, %386 : vector<2x32xf32>
    %462 = arith.addf %460, %461 : vector<2x32xf32>
    %463 = arith.index_cast %c5_i32 : i32 to index
    %c0_109 = arith.constant 0 : index
    %c0_110 = arith.constant 0 : index
    %464 = vector.load %arg5[%463, %c0_109, %c0_110] : memref<8x2x32xf32, #tpu.memory_space<vmem>>, vector<1x2x32xf32>
    %465 = vector.shape_cast %464 : vector<1x2x32xf32> to vector<2x32xf32>
    %466 = vector.shape_cast %430 : vector<2x32xf32> to vector<1x2x32xf32>
    tpu.vector_store %arg5[%463, %c0_109, %c0_110], %466 {strides = array<i32>} : memref<8x2x32xf32, #tpu.memory_space<vmem>>, vector<1x2x32xf32>,
    %467 = arith.index_cast %c5_i32 : i32 to index
    %c0_111 = arith.constant 0 : index
    %c0_112 = arith.constant 0 : index
    %468 = vector.load %arg6[%467, %c0_111, %c0_112] : memref<8x2x32xf32, #tpu.memory_space<vmem>>, vector<1x2x32xf32>
    %469 = vector.shape_cast %468 : vector<1x2x32xf32> to vector<2x32xf32>
    %470 = vector.shape_cast %462 : vector<2x32xf32> to vector<1x2x32xf32>
    tpu.vector_store %arg6[%467, %c0_111, %c0_112], %470 {strides = array<i32>} : memref<8x2x32xf32, #tpu.memory_space<vmem>>, vector<1x2x32xf32>,
    %c6_i32 = arith.constant 6 : i32
    %471 = arith.truncf %430 : vector<2x32xf32> to vector<2x32xbf16>
    %cst_113 = arith.constant dense<0.000000e+00> : vector<2x96xf32>
    %472 = tpu.matmul %471, %4, %cst_113 {dimension_numbers = #tpu.dot_dimension_numbers<[1], [0], [0], [1], [0, 0, 1, 1], [], []>} : vector<2x32xbf16>, vector<32x96xbf16>, vector<2x96xf32> -> vector<2x96xf32>
    %473 = arith.truncf %462 : vector<2x32xf32> to vector<2x32xbf16>
    %cst_114 = arith.constant dense<0.000000e+00> : vector<2x96xf32>
    %474 = tpu.matmul %473, %6, %cst_114 {dimension_numbers = #tpu.dot_dimension_numbers<[1], [0], [0], [1], [0, 0, 1, 1], [], []>} : vector<2x32xbf16>, vector<32x96xbf16>, vector<2x96xf32> -> vector<2x96xf32>
    %475 = arith.index_cast %c6_i32 : i32 to index
    %c0_115 = arith.constant 0 : index
    %c0_116 = arith.constant 0 : index
    %476 = vector.load %arg1[%475, %c0_115, %c0_116] : memref<8x2x96xbf16, #tpu.memory_space<vmem>>, vector<1x2x96xbf16>
    %477 = vector.shape_cast %476 : vector<1x2x96xbf16> to vector<2x96xbf16>
    %478 = arith.extf %477 : vector<2x96xbf16> to vector<2x96xf32>
    %479 = vector.extract_strided_slice %478 {offsets = [0, 0], sizes = [2, 32], strides = [1, 1]} : vector<2x96xf32> to vector<2x32xf32>
    %480 = vector.extract_strided_slice %472 {offsets = [0, 0], sizes = [2, 32], strides = [1, 1]} : vector<2x96xf32> to vector<2x32xf32>
    %481 = arith.addf %479, %480 : vector<2x32xf32>
    %482 = arith.negf %481 : vector<2x32xf32>
    %483 = math.exp %482 : vector<2x32xf32>
    %cst_117 = arith.constant 1.000000e+00 : f32
    %484 = vector.broadcast %cst_117 : f32 to vector<2x32xf32>
    %485 = arith.addf %484, %483 : vector<2x32xf32>
    %486 = arith.divf %484, %485 : vector<2x32xf32>
    %487 = vector.extract_strided_slice %478 {offsets = [0, 32], sizes = [2, 32], strides = [1, 1]} : vector<2x96xf32> to vector<2x32xf32>
    %488 = vector.extract_strided_slice %472 {offsets = [0, 32], sizes = [2, 32], strides = [1, 1]} : vector<2x96xf32> to vector<2x32xf32>
    %489 = arith.addf %487, %488 : vector<2x32xf32>
    %490 = arith.negf %489 : vector<2x32xf32>
    %491 = math.exp %490 : vector<2x32xf32>
    %cst_118 = arith.constant 1.000000e+00 : f32
    %492 = vector.broadcast %cst_118 : f32 to vector<2x32xf32>
    %493 = arith.addf %492, %491 : vector<2x32xf32>
    %494 = arith.divf %492, %493 : vector<2x32xf32>
    %495 = vector.extract_strided_slice %478 {offsets = [0, 64], sizes = [2, 32], strides = [1, 1]} : vector<2x96xf32> to vector<2x32xf32>
    %496 = vector.extract_strided_slice %472 {offsets = [0, 64], sizes = [2, 32], strides = [1, 1]} : vector<2x96xf32> to vector<2x32xf32>
    %497 = vector.broadcast %8 : vector<1x32xf32> to vector<2x32xf32>
    %498 = arith.addf %496, %497 : vector<2x32xf32>
    %499 = arith.mulf %486, %498 : vector<2x32xf32>
    %500 = arith.addf %495, %499 : vector<2x32xf32>
    %501 = math.tanh %500 : vector<2x32xf32>
    %cst_119 = arith.constant 1.000000e+00 : f32
    %502 = vector.broadcast %cst_119 : f32 to vector<2x32xf32>
    %503 = arith.subf %502, %494 : vector<2x32xf32>
    %504 = arith.mulf %503, %501 : vector<2x32xf32>
    %505 = arith.mulf %494, %430 : vector<2x32xf32>
    %506 = arith.addf %504, %505 : vector<2x32xf32>
    %507 = arith.index_cast %c6_i32 : i32 to index
    %c0_120 = arith.constant 0 : index
    %c0_121 = arith.constant 0 : index
    %508 = vector.load %arg2[%507, %c0_120, %c0_121] : memref<8x2x96xbf16, #tpu.memory_space<vmem>>, vector<1x2x96xbf16>
    %509 = vector.shape_cast %508 : vector<1x2x96xbf16> to vector<2x96xbf16>
    %510 = arith.extf %509 : vector<2x96xbf16> to vector<2x96xf32>
    %511 = vector.extract_strided_slice %510 {offsets = [0, 0], sizes = [2, 32], strides = [1, 1]} : vector<2x96xf32> to vector<2x32xf32>
    %512 = vector.extract_strided_slice %474 {offsets = [0, 0], sizes = [2, 32], strides = [1, 1]} : vector<2x96xf32> to vector<2x32xf32>
    %513 = arith.addf %511, %512 : vector<2x32xf32>
    %514 = arith.negf %513 : vector<2x32xf32>
    %515 = math.exp %514 : vector<2x32xf32>
    %cst_122 = arith.constant 1.000000e+00 : f32
    %516 = vector.broadcast %cst_122 : f32 to vector<2x32xf32>
    %517 = arith.addf %516, %515 : vector<2x32xf32>
    %518 = arith.divf %516, %517 : vector<2x32xf32>
    %519 = vector.extract_strided_slice %510 {offsets = [0, 32], sizes = [2, 32], strides = [1, 1]} : vector<2x96xf32> to vector<2x32xf32>
    %520 = vector.extract_strided_slice %474 {offsets = [0, 32], sizes = [2, 32], strides = [1, 1]} : vector<2x96xf32> to vector<2x32xf32>
    %521 = arith.addf %519, %520 : vector<2x32xf32>
    %522 = arith.negf %521 : vector<2x32xf32>
    %523 = math.exp %522 : vector<2x32xf32>
    %cst_123 = arith.constant 1.000000e+00 : f32
    %524 = vector.broadcast %cst_123 : f32 to vector<2x32xf32>
    %525 = arith.addf %524, %523 : vector<2x32xf32>
    %526 = arith.divf %524, %525 : vector<2x32xf32>
    %527 = vector.extract_strided_slice %510 {offsets = [0, 64], sizes = [2, 32], strides = [1, 1]} : vector<2x96xf32> to vector<2x32xf32>
    %528 = vector.extract_strided_slice %474 {offsets = [0, 64], sizes = [2, 32], strides = [1, 1]} : vector<2x96xf32> to vector<2x32xf32>
    %529 = vector.broadcast %10 : vector<1x32xf32> to vector<2x32xf32>
    %530 = arith.addf %528, %529 : vector<2x32xf32>
    %531 = arith.mulf %518, %530 : vector<2x32xf32>
    %532 = arith.addf %527, %531 : vector<2x32xf32>
    %533 = math.tanh %532 : vector<2x32xf32>
    %cst_124 = arith.constant 1.000000e+00 : f32
    %534 = vector.broadcast %cst_124 : f32 to vector<2x32xf32>
    %535 = arith.subf %534, %526 : vector<2x32xf32>
    %536 = arith.mulf %535, %533 : vector<2x32xf32>
    %537 = arith.mulf %526, %462 : vector<2x32xf32>
    %538 = arith.addf %536, %537 : vector<2x32xf32>
    %539 = arith.index_cast %c6_i32 : i32 to index
    %c0_125 = arith.constant 0 : index
    %c0_126 = arith.constant 0 : index
    %540 = vector.load %arg5[%539, %c0_125, %c0_126] : memref<8x2x32xf32, #tpu.memory_space<vmem>>, vector<1x2x32xf32>
    %541 = vector.shape_cast %540 : vector<1x2x32xf32> to vector<2x32xf32>
    %542 = vector.shape_cast %506 : vector<2x32xf32> to vector<1x2x32xf32>
    tpu.vector_store %arg5[%539, %c0_125, %c0_126], %542 {strides = array<i32>} : memref<8x2x32xf32, #tpu.memory_space<vmem>>, vector<1x2x32xf32>,
    %543 = arith.index_cast %c6_i32 : i32 to index
    %c0_127 = arith.constant 0 : index
    %c0_128 = arith.constant 0 : index
    %544 = vector.load %arg6[%543, %c0_127, %c0_128] : memref<8x2x32xf32, #tpu.memory_space<vmem>>, vector<1x2x32xf32>
    %545 = vector.shape_cast %544 : vector<1x2x32xf32> to vector<2x32xf32>
    %546 = vector.shape_cast %538 : vector<2x32xf32> to vector<1x2x32xf32>
    tpu.vector_store %arg6[%543, %c0_127, %c0_128], %546 {strides = array<i32>} : memref<8x2x32xf32, #tpu.memory_space<vmem>>, vector<1x2x32xf32>,
    %c7_i32 = arith.constant 7 : i32
    %547 = arith.truncf %506 : vector<2x32xf32> to vector<2x32xbf16>
    %cst_129 = arith.constant dense<0.000000e+00> : vector<2x96xf32>
    %548 = tpu.matmul %547, %4, %cst_129 {dimension_numbers = #tpu.dot_dimension_numbers<[1], [0], [0], [1], [0, 0, 1, 1], [], []>} : vector<2x32xbf16>, vector<32x96xbf16>, vector<2x96xf32> -> vector<2x96xf32>
    %549 = arith.truncf %538 : vector<2x32xf32> to vector<2x32xbf16>
    %cst_130 = arith.constant dense<0.000000e+00> : vector<2x96xf32>
    %550 = tpu.matmul %549, %6, %cst_130 {dimension_numbers = #tpu.dot_dimension_numbers<[1], [0], [0], [1], [0, 0, 1, 1], [], []>} : vector<2x32xbf16>, vector<32x96xbf16>, vector<2x96xf32> -> vector<2x96xf32>
    %551 = arith.index_cast %c7_i32 : i32 to index
    %c0_131 = arith.constant 0 : index
    %c0_132 = arith.constant 0 : index
    %552 = vector.load %arg1[%551, %c0_131, %c0_132] : memref<8x2x96xbf16, #tpu.memory_space<vmem>>, vector<1x2x96xbf16>
    %553 = vector.shape_cast %552 : vector<1x2x96xbf16> to vector<2x96xbf16>
    %554 = arith.extf %553 : vector<2x96xbf16> to vector<2x96xf32>
    %555 = vector.extract_strided_slice %554 {offsets = [0, 0], sizes = [2, 32], strides = [1, 1]} : vector<2x96xf32> to vector<2x32xf32>
    %556 = vector.extract_strided_slice %548 {offsets = [0, 0], sizes = [2, 32], strides = [1, 1]} : vector<2x96xf32> to vector<2x32xf32>
    %557 = arith.addf %555, %556 : vector<2x32xf32>
    %558 = arith.negf %557 : vector<2x32xf32>
    %559 = math.exp %558 : vector<2x32xf32>
    %cst_133 = arith.constant 1.000000e+00 : f32
    %560 = vector.broadcast %cst_133 : f32 to vector<2x32xf32>
    %561 = arith.addf %560, %559 : vector<2x32xf32>
    %562 = arith.divf %560, %561 : vector<2x32xf32>
    %563 = vector.extract_strided_slice %554 {offsets = [0, 32], sizes = [2, 32], strides = [1, 1]} : vector<2x96xf32> to vector<2x32xf32>
    %564 = vector.extract_strided_slice %548 {offsets = [0, 32], sizes = [2, 32], strides = [1, 1]} : vector<2x96xf32> to vector<2x32xf32>
    %565 = arith.addf %563, %564 : vector<2x32xf32>
    %566 = arith.negf %565 : vector<2x32xf32>
    %567 = math.exp %566 : vector<2x32xf32>
    %cst_134 = arith.constant 1.000000e+00 : f32
    %568 = vector.broadcast %cst_134 : f32 to vector<2x32xf32>
    %569 = arith.addf %568, %567 : vector<2x32xf32>
    %570 = arith.divf %568, %569 : vector<2x32xf32>
    %571 = vector.extract_strided_slice %554 {offsets = [0, 64], sizes = [2, 32], strides = [1, 1]} : vector<2x96xf32> to vector<2x32xf32>
    %572 = vector.extract_strided_slice %548 {offsets = [0, 64], sizes = [2, 32], strides = [1, 1]} : vector<2x96xf32> to vector<2x32xf32>
    %573 = vector.broadcast %8 : vector<1x32xf32> to vector<2x32xf32>
    %574 = arith.addf %572, %573 : vector<2x32xf32>
    %575 = arith.mulf %562, %574 : vector<2x32xf32>
    %576 = arith.addf %571, %575 : vector<2x32xf32>
    %577 = math.tanh %576 : vector<2x32xf32>
    %cst_135 = arith.constant 1.000000e+00 : f32
    %578 = vector.broadcast %cst_135 : f32 to vector<2x32xf32>
    %579 = arith.subf %578, %570 : vector<2x32xf32>
    %580 = arith.mulf %579, %577 : vector<2x32xf32>
    %581 = arith.mulf %570, %506 : vector<2x32xf32>
    %582 = arith.addf %580, %581 : vector<2x32xf32>
    %583 = arith.index_cast %c7_i32 : i32 to index
    %c0_136 = arith.constant 0 : index
    %c0_137 = arith.constant 0 : index
    %584 = vector.load %arg2[%583, %c0_136, %c0_137] : memref<8x2x96xbf16, #tpu.memory_space<vmem>>, vector<1x2x96xbf16>
    %585 = vector.shape_cast %584 : vector<1x2x96xbf16> to vector<2x96xbf16>
    %586 = arith.extf %585 : vector<2x96xbf16> to vector<2x96xf32>
    %587 = vector.extract_strided_slice %586 {offsets = [0, 0], sizes = [2, 32], strides = [1, 1]} : vector<2x96xf32> to vector<2x32xf32>
    %588 = vector.extract_strided_slice %550 {offsets = [0, 0], sizes = [2, 32], strides = [1, 1]} : vector<2x96xf32> to vector<2x32xf32>
    %589 = arith.addf %587, %588 : vector<2x32xf32>
    %590 = arith.negf %589 : vector<2x32xf32>
    %591 = math.exp %590 : vector<2x32xf32>
    %cst_138 = arith.constant 1.000000e+00 : f32
    %592 = vector.broadcast %cst_138 : f32 to vector<2x32xf32>
    %593 = arith.addf %592, %591 : vector<2x32xf32>
    %594 = arith.divf %592, %593 : vector<2x32xf32>
    %595 = vector.extract_strided_slice %586 {offsets = [0, 32], sizes = [2, 32], strides = [1, 1]} : vector<2x96xf32> to vector<2x32xf32>
    %596 = vector.extract_strided_slice %550 {offsets = [0, 32], sizes = [2, 32], strides = [1, 1]} : vector<2x96xf32> to vector<2x32xf32>
    %597 = arith.addf %595, %596 : vector<2x32xf32>
    %598 = arith.negf %597 : vector<2x32xf32>
    %599 = math.exp %598 : vector<2x32xf32>
    %cst_139 = arith.constant 1.000000e+00 : f32
    %600 = vector.broadcast %cst_139 : f32 to vector<2x32xf32>
    %601 = arith.addf %600, %599 : vector<2x32xf32>
    %602 = arith.divf %600, %601 : vector<2x32xf32>
    %603 = vector.extract_strided_slice %586 {offsets = [0, 64], sizes = [2, 32], strides = [1, 1]} : vector<2x96xf32> to vector<2x32xf32>
    %604 = vector.extract_strided_slice %550 {offsets = [0, 64], sizes = [2, 32], strides = [1, 1]} : vector<2x96xf32> to vector<2x32xf32>
    %605 = vector.broadcast %10 : vector<1x32xf32> to vector<2x32xf32>
    %606 = arith.addf %604, %605 : vector<2x32xf32>
    %607 = arith.mulf %594, %606 : vector<2x32xf32>
    %608 = arith.addf %603, %607 : vector<2x32xf32>
    %609 = math.tanh %608 : vector<2x32xf32>
    %cst_140 = arith.constant 1.000000e+00 : f32
    %610 = vector.broadcast %cst_140 : f32 to vector<2x32xf32>
    %611 = arith.subf %610, %602 : vector<2x32xf32>
    %612 = arith.mulf %611, %609 : vector<2x32xf32>
    %613 = arith.mulf %602, %538 : vector<2x32xf32>
    %614 = arith.addf %612, %613 : vector<2x32xf32>
    %615 = arith.index_cast %c7_i32 : i32 to index
    %c0_141 = arith.constant 0 : index
    %c0_142 = arith.constant 0 : index
    %616 = vector.load %arg5[%615, %c0_141, %c0_142] : memref<8x2x32xf32, #tpu.memory_space<vmem>>, vector<1x2x32xf32>
    %617 = vector.shape_cast %616 : vector<1x2x32xf32> to vector<2x32xf32>
    %618 = vector.shape_cast %582 : vector<2x32xf32> to vector<1x2x32xf32>
    tpu.vector_store %arg5[%615, %c0_141, %c0_142], %618 {strides = array<i32>} : memref<8x2x32xf32, #tpu.memory_space<vmem>>, vector<1x2x32xf32>,
    %619 = arith.index_cast %c7_i32 : i32 to index
    %c0_143 = arith.constant 0 : index
    %c0_144 = arith.constant 0 : index
    %620 = vector.load %arg6[%619, %c0_143, %c0_144] : memref<8x2x32xf32, #tpu.memory_space<vmem>>, vector<1x2x32xf32>
    %621 = vector.shape_cast %620 : vector<1x2x32xf32> to vector<2x32xf32>
    %622 = vector.shape_cast %614 : vector<2x32xf32> to vector<1x2x32xf32>
    tpu.vector_store %arg6[%619, %c0_143, %c0_144], %622 {strides = array<i32>} : memref<8x2x32xf32, #tpu.memory_space<vmem>>, vector<1x2x32xf32>,
    %c8_i32 = arith.constant 8 : i32
    %c0_145 = arith.constant 0 : index
    %c0_146 = arith.constant 0 : index
    %c0_147 = arith.constant 0 : index
    %623 = vector.load %arg7[%c0_145, %c0_146, %c0_147] : memref<2x2x32xf32, #tpu.memory_space<vmem>>, vector<1x2x32xf32>
    %624 = vector.shape_cast %623 : vector<1x2x32xf32> to vector<2x32xf32>
    %625 = vector.shape_cast %582 : vector<2x32xf32> to vector<1x2x32xf32>
    tpu.vector_store %arg7[%c0_145, %c0_146, %c0_147], %625 {strides = array<i32>} : memref<2x2x32xf32, #tpu.memory_space<vmem>>, vector<1x2x32xf32>,
    %c1_148 = arith.constant 1 : index
    %c0_149 = arith.constant 0 : index
    %c0_150 = arith.constant 0 : index
    %626 = vector.load %arg7[%c1_148, %c0_149, %c0_150] : memref<2x2x32xf32, #tpu.memory_space<vmem>>, vector<1x2x32xf32>
    %627 = vector.shape_cast %626 : vector<1x2x32xf32> to vector<2x32xf32>
    %628 = vector.shape_cast %614 : vector<2x32xf32> to vector<1x2x32xf32>
    tpu.vector_store %arg7[%c1_148, %c0_149, %c0_150], %628 {strides = array<i32>} : memref<2x2x32xf32, #tpu.memory_space<vmem>>, vector<1x2x32xf32>,
    return
  }
  func.func @transform_0(%arg0: i32) -> (i32, i32, i32) {
    %c0_i32 = arith.constant 0 : i32
    %c0_i32_0 = arith.constant 0 : i32
    %c0_i32_1 = arith.constant 0 : i32
    return %arg0, %c0_i32, %c0_i32_0 : i32, i32, i32
  }
  func.func @transform_1(%arg0: i32) -> (i32, i32, i32) {
    %c0_i32 = arith.constant 0 : i32
    %c0_i32_0 = arith.constant 0 : i32
    %c0_i32_1 = arith.constant 0 : i32
    return %arg0, %c0_i32, %c0_i32_0 : i32, i32, i32
  }
  func.func @transform_2(%arg0: i32) -> (i32, i32, i32) {
    %c0_i32 = arith.constant 0 : i32
    %c0_i32_0 = arith.constant 0 : i32
    %c0_i32_1 = arith.constant 0 : i32
    %c0_i32_2 = arith.constant 0 : i32
    return %c0_i32, %c0_i32_0, %c0_i32_1 : i32, i32, i32
  }
  func.func @transform_3(%arg0: i32) -> (i32, i32, i32) {
    %c0_i32 = arith.constant 0 : i32
    %c0_i32_0 = arith.constant 0 : i32
    %c0_i32_1 = arith.constant 0 : i32
    %c0_i32_2 = arith.constant 0 : i32
    return %c0_i32, %c0_i32_0, %c0_i32_1 : i32, i32, i32
  }
  func.func @transform_4(%arg0: i32) -> (i32, i32, i32) {
    %c0_i32 = arith.constant 0 : i32
    %c0_i32_0 = arith.constant 0 : i32
    %c0_i32_1 = arith.constant 0 : i32
    return %arg0, %c0_i32, %c0_i32_0 : i32, i32, i32
  }
  func.func @transform_5(%arg0: i32) -> (i32, i32, i32) {
    %c0_i32 = arith.constant 0 : i32
    %c0_i32_0 = arith.constant 0 : i32
    %c0_i32_1 = arith.constant 0 : i32
    return %arg0, %c0_i32, %c0_i32_0 : i32, i32, i32
  }
}

</mosaic_0001>

<llo_original>
// kernel: encoder_rnn_forward.1
$region0: #{encoder_rnn_forward.1}
  #allocation0 [shape = 'u32[]', space=smem, size = 0x4, offset = 0x4, fixed_abs, tag = 'smem constant byte address 0x4 - core index']
  #allocation1 [shape = 'u32[72,128]{1,0:T(1,128)}', space=vmem, size = 0x9000, scoped, tag = 'internal scratch']
  #allocation2 [shape = 'f32[2,2,32]{2,1,0:T(2,128)}', space=vmem, size = 0x800, scoped, tag = 'scratch operand']
  %s0 = inlined_call_operand.vmem [shape: bf16[8,2,96], index: 0, kind: input, shape index: {}]
  %s1 = inlined_call_operand.vmem [shape: bf16[8,2,96], index: 1, kind: input, shape index: {}]
  %s2 = inlined_call_operand.vmem [shape: bf16[2,32,96], index: 2, kind: input, shape index: {}]
  %s3 = inlined_call_operand.vmem [shape: f32[2,1,32], index: 3, kind: input, shape index: {}]
  %s4 = inlined_call_operand.vmem [shape: f32[8,2,32], index: 4, kind: output, shape index: {0}]
  %s5 = inlined_call_operand.vmem [shape: f32[8,2,32], index: 5, kind: output, shape index: {1}]
  %6 = xla_tuple %s4, %s5
  %s7 = sld [smem:[#allocation0]]
  $region38: #{encoder_rnn_forward.1} parent=0
    _
  %s9 = ssub.s32 1, %s7
  %s10 = scalar_select 0, %s9, %s7
  // Predicated region
  $region2: #{encoder_rnn_forward.1} parent=0 // pred_check
    _
  $region3: #{encoder_rnn_forward.1} parent=0 // pred_check_branch
    %12 = sbr.rel (0) target = $region5
  $region4: #{encoder_rnn_forward.1} parent=0 // pred_region
    _
  $region5: #{encoder_rnn_forward.1} parent=0 // pred_fallthru
    _
  // Predicated region
  $region6: #{encoder_rnn_forward.1} parent=0 // pred_check
    _
  $region7: #{encoder_rnn_forward.1} parent=0 // pred_check_branch
    %14 = sbr.rel (0) target = $region9
  $region8: #{encoder_rnn_forward.1} parent=0 // pred_region
    _
  $region9: #{encoder_rnn_forward.1} parent=0 // pred_fallthru
    _
  // Predicated region
  $region10: #{encoder_rnn_forward.1} parent=0 // pred_check
    _
  $region11: #{encoder_rnn_forward.1} parent=0 // pred_check_branch
    %16 = sbr.rel (0) target = $region13
  $region12: #{encoder_rnn_forward.1} parent=0 // pred_region
    _
  $region13: #{encoder_rnn_forward.1} parent=0 // pred_fallthru
    _
  // Predicated region
  $region14: #{encoder_rnn_forward.1} parent=0 // pred_check
    _
  $region15: #{encoder_rnn_forward.1} parent=0 // pred_check_branch
    %18 = sbr.rel (0) target = $region17
  $region16: #{encoder_rnn_forward.1} parent=0 // pred_region
    _
  $region17: #{encoder_rnn_forward.1} parent=0 // pred_fallthru
    _
  %p20 = scmp.eq.s32.totalorder 0, 0
  // Predicated region
  $region18: #{encoder_rnn_forward.1} parent=0 // pred_check
    %p21 = pneg %p20
  $region19: #{encoder_rnn_forward.1} parent=0 // pred_check_branch
    %23 = sbr.rel (%p21) target = $region21
  $region20: #{encoder_rnn_forward.1} parent=0 // pred_region
    %vm24 = vcmask 254976
    %25 = vst.msk [vmem:[#allocation2] sm:$0x3] %vm24, 0.0
    %26 = vst.msk [vmem:[#allocation2 + $0x2] sm:$0x3] %vm24, 0.0
  $region21: #{encoder_rnn_forward.1} parent=0 // pred_fallthru
    _
  %v27 = vld [vmem:[%s2] sm:$0xf]
  %v28 = vld [vmem:[%s2 + $0x4] sm:$0xf]
  %v29 = vld [vmem:[%s2 + $0x8] sm:$0xf]
  %v30 = vld [vmem:[%s2 + $0xc] sm:$0xf]
  %s31 = scalar_lea.vmem %s2, 16
  %v32 = vld [vmem:[%s31] sm:$0xf]
  %v33 = vld [vmem:[%s31 + $0x4] sm:$0xf]
  %v34 = vld [vmem:[%s31 + $0x8] sm:$0xf]
  %v35 = vld [vmem:[%s31 + $0xc] sm:$0xf]
  %v36 = vld [vmem:[%s3] sm:$0x1]
  %s37 = scalar_lea.vmem %s3, 1
  %v38 = vld [vmem:[%s37] sm:$0x1]
  %v39 = vld [vmem:[#allocation2] sm:$0x3]
  %s40 = scalar_lea.vmem [#allocation2], 2
  %v41 = vld [vmem:[%s40] sm:$0x3]
  %v42 = vpack.c.bf16 %v39, %v39
  %v47 = vunpack.c.l.b16 %v27
  %v48 = vunpack.c.l.b16 %v28
  %v49 = vunpack.c.l.b16 %v29
  %v50 = vunpack.c.l.b16 %v30
  %v51 = vpack.c.b16 %v48, %v47
  %v52 = vpack.c.b16 %v50, %v49
  %vm55 = vcmask 261120
  %v57 = vsel %vm55, %v42, 0
  %59 = vmatpush.bf16.msra.mxu0 0
  %60 = vmatpush.bf16.msra.mxu0 0
  %61 = vmatpush.bf16.msra.mxu0 0
  %62 = vmatpush.bf16.msra.mxu0 0
  %63 = vmatpush.bf16.msra.mxu0 0
  %64 = vmatpush.bf16.msra.mxu0 0
  %65 = vmatpush.bf16.msra.mxu0 %v52
  %66 = vmatpush.bf16.msra.mxu0 %v51
  %67 = vmatmul.bf16.gmra.mxu0 %v57
  %v68 = vpop.f32.mrf.mxu0
  %v69 = vadd.f32 0.0, %v68
  %v70 = vpop.f32.mrf.mxu0
  %71 = vdwg.mxu0
  %v72 = vpack.c.bf16 %v41, %v41
  %v77 = vunpack.c.l.b16 %v32
  %v78 = vunpack.c.l.b16 %v33
  %v79 = vunpack.c.l.b16 %v34
  %v80 = vunpack.c.l.b16 %v35
  %v81 = vpack.c.b16 %v78, %v77
  %v82 = vpack.c.b16 %v80, %v79
  %v86 = vsel %vm55, %v72, 0
  %88 = vmatpush.bf16.msra.mxu0 0
  %89 = vmatpush.bf16.msra.mxu0 0
  %90 = vmatpush.bf16.msra.mxu0 0
  %91 = vmatpush.bf16.msra.mxu0 0
  %92 = vmatpush.bf16.msra.mxu0 0
  %93 = vmatpush.bf16.msra.mxu0 0
  %94 = vmatpush.bf16.msra.mxu0 %v82
  %95 = vmatpush.bf16.msra.mxu0 %v81
  %96 = vmatmul.bf16.gmra.mxu0 %v86
  %v97 = vpop.f32.mrf.mxu0
  %v98 = vadd.f32 0.0, %v97
  %v99 = vpop.f32.mrf.mxu0
  %100 = vdwg.mxu0
  %v101 = vld [vmem:[%s0] sm:$0x1]
  %v102 = vunpack.c.l.bf16 %v101
  %v103 = vadd.f32 %v102, %v69
  %v104 = vxor.u32 %v103, 2147483648
  %v105 = vmul.f32 %v104, 1.442695
  %v106 = vpow.pop %v105
  %v107 = vadd.f32 %v106, 1.0
  %v108 = vrcp.pop %v107
  %v109 = vmul.f32 %v107, %v108
  %v110 = vsub.f32 1.0, %v109
  %v111 = vmul.f32 %v108, %v110
  %v112 = vadd.f32 %v108, %v111
  %vm113 = vweird.f32 %v107
  %vm114 = vweird.f32 %v108
  %vm115 = vmor %vm113, %vm114
  %v116 = vsel %vm115, %v108, %v112
  %v117 = vand.u32 2147483647, %v107
  %vm118 = vcmp.eq.f32.partialorder %v117, 8.507059e+37
  %v119 = vand.u32 %v107, 2147483648
  %v120 = vor.u32 1.1754944e-38, %v119
  %v121 = vsel %vm118, %v120, %v116
  %v122 = vmul.f32 1.0, %v121
  %v124 = vperm.slane %v36, 0
  %125 = vrot.lane.b32.xlu0 %v124, 64
  %v126 = vpop.permute.xlu0 %125
  %v128 = vadd.f32 %v69, %v126
  %130 = vrot.lane.b32.xlu0 %v128, 64
  %v131 = vpop.permute.xlu0 %130
  %v133 = vmul.f32 %v122, %v131
  %135 = vrot.lane.b32.xlu0 %v133, 64
  %v136 = vpop.permute.xlu0 %135
  %v138 = vadd.f32 %v102, %v136
  %v139 = vtanh.pop %v138
  %v140 = vsub.f32 1.0, %v122
  %142 = vrot.lane.b32.xlu0 %v139, 96
  %v143 = vpop.permute.xlu0 %142
  %v145 = vmul.f32 %v140, %v143
  %147 = vrot.lane.b32.xlu0 %v39, 32
  %v148 = vpop.permute.xlu0 %147
  %v150 = vmul.f32 %v122, %v148
  %v151 = vadd.f32 %v145, %v150
  %v152 = vld [vmem:[%s1] sm:$0x1]
  %v153 = vunpack.c.l.bf16 %v152
  %v154 = vadd.f32 %v153, %v98
  %v155 = vxor.u32 %v154, 2147483648
  %v156 = vmul.f32 %v155, 1.442695
  %v157 = vpow.pop %v156
  %v158 = vadd.f32 %v157, 1.0
  %v159 = vrcp.pop %v158
  %v160 = vmul.f32 %v158, %v159
  %v161 = vsub.f32 1.0, %v160
  %v162 = vmul.f32 %v159, %v161
  %v163 = vadd.f32 %v159, %v162
  %vm164 = vweird.f32 %v158
  %vm165 = vweird.f32 %v159
  %vm166 = vmor %vm164, %vm165
  %v167 = vsel %vm166, %v159, %v163
  %v168 = vand.u32 2147483647, %v158
  %vm169 = vcmp.eq.f32.partialorder %v168, 8.507059e+37
  %v170 = vand.u32 %v158, 2147483648
  %v171 = vor.u32 1.1754944e-38, %v170
  %v172 = vsel %vm169, %v171, %v167
  %v173 = vmul.f32 1.0, %v172
  %v175 = vperm.slane %v38, 0
  %176 = vrot.lane.b32.xlu0 %v175, 64
  %v177 = vpop.permute.xlu0 %176
  %v179 = vadd.f32 %v98, %v177
  %181 = vrot.lane.b32.xlu0 %v179, 64
  %v182 = vpop.permute.xlu0 %181
  %v184 = vmul.f32 %v173, %v182
  %186 = vrot.lane.b32.xlu0 %v184, 64
  %v187 = vpop.permute.xlu0 %186
  %v189 = vadd.f32 %v153, %v187
  %v190 = vtanh.pop %v189
  %v191 = vsub.f32 1.0, %v173
  %193 = vrot.lane.b32.xlu0 %v190, 96
  %v194 = vpop.permute.xlu0 %193
  %v196 = vmul.f32 %v191, %v194
  %198 = vrot.lane.b32.xlu0 %v41, 32
  %v199 = vpop.permute.xlu0 %198
  %v201 = vmul.f32 %v173, %v199
  %v202 = vadd.f32 %v196, %v201
  %204 = vst [vmem:[#allocation1] ss:$4 sm:$0xff] %v151
  %v205 = vld.sshfl [vmem:[#allocation1] sm:$0xff pattern:$0x73625140]
  %206 = vrot.lane.b32.xlu0 %v205, 96
  %v207 = vpop.permute.xlu0 %206
  %vm209 = vcmask 254976
  %210 = vst.msk [vmem:[%s4] sm:$0x3] %vm209, %v207
  %212 = vst [vmem:[#allocation1] ss:$4 sm:$0xff] %v202
  %v213 = vld.sshfl [vmem:[#allocation1] sm:$0xff pattern:$0x73625140]
  %214 = vrot.lane.b32.xlu0 %v213, 96
  %v215 = vpop.permute.xlu0 %214
  %217 = vst.msk [vmem:[%s5] sm:$0x3] %vm209, %v215
  %v218 = vpack.c.bf16 %v151, %v151
  %220 = vrot.lane.b32.xlu0 %v218, 96
  %v221 = vpop.permute.xlu0 %220
  %v223 = vsel %vm55, %v221, 0
  %225 = vmatpush.bf16.msra.mxu0 0
  %226 = vmatpush.bf16.msra.mxu0 0
  %227 = vmatpush.bf16.msra.mxu0 0
  %228 = vmatpush.bf16.msra.mxu0 0
  %229 = vmatpush.bf16.msra.mxu0 0
  %230 = vmatpush.bf16.msra.mxu0 0
  %231 = vmatpush.bf16.msra.mxu0 %v52
  %232 = vmatpush.bf16.msra.mxu0 %v51
  %233 = vmatmul.bf16.gmra.mxu0 %v223
  %v234 = vpop.f32.mrf.mxu0
  %v235 = vadd.f32 0.0, %v234
  %v236 = vpop.f32.mrf.mxu0
  %237 = vdwg.mxu0
  %v238 = vpack.c.bf16 %v202, %v202
  %240 = vrot.lane.b32.xlu0 %v238, 96
  %v241 = vpop.permute.xlu0 %240
  %v243 = vsel %vm55, %v241, 0
  %245 = vmatpush.bf16.msra.mxu0 0
  %246 = vmatpush.bf16.msra.mxu0 0
  %247 = vmatpush.bf16.msra.mxu0 0
  %248 = vmatpush.bf16.msra.mxu0 0
  %249 = vmatpush.bf16.msra.mxu0 0
  %250 = vmatpush.bf16.msra.mxu0 0
  %251 = vmatpush.bf16.msra.mxu0 %v82
  %252 = vmatpush.bf16.msra.mxu0 %v81
  %253 = vmatmul.bf16.gmra.mxu0 %v243
  %v254 = vpop.f32.mrf.mxu0
  %v255 = vadd.f32 0.0, %v254
  %v256 = vpop.f32.mrf.mxu0
  %257 = vdwg.mxu0
  %s258 = scalar_lea.vmem %s0, 1
  %v259 = vld [vmem:[%s258] sm:$0x1]
  %v260 = vunpack.c.l.bf16 %v259
  %v261 = vadd.f32 %v260, %v235
  %v262 = vxor.u32 %v261, 2147483648
  %v263 = vmul.f32 %v262, 1.442695
  %v264 = vpow.pop %v263
  %v265 = vadd.f32 %v264, 1.0
  %v266 = vrcp.pop %v265
  %v267 = vmul.f32 %v265, %v266
  %v268 = vsub.f32 1.0, %v267
  %v269 = vmul.f32 %v266, %v268
  %v270 = vadd.f32 %v266, %v269
  %vm271 = vweird.f32 %v265
  %vm272 = vweird.f32 %v266
  %vm273 = vmor %vm271, %vm272
  %v274 = vsel %vm273, %v266, %v270
  %v275 = vand.u32 2147483647, %v265
  %vm276 = vcmp.eq.f32.partialorder %v275, 8.507059e+37
  %v277 = vand.u32 %v265, 2147483648
  %v278 = vor.u32 1.1754944e-38, %v277
  %v279 = vsel %vm276, %v278, %v274
  %v280 = vmul.f32 1.0, %v279
  %v281 = vadd.f32 %v235, %v126
  %283 = vrot.lane.b32.xlu0 %v281, 64
  %v284 = vpop.permute.xlu0 %283
  %v286 = vmul.f32 %v280, %v284
  %288 = vrot.lane.b32.xlu0 %v286, 64
  %v289 = vpop.permute.xlu0 %288
  %v291 = vadd.f32 %v260, %v289
  %v292 = vtanh.pop %v291
  %v293 = vsub.f32 1.0, %v280
  %295 = vrot.lane.b32.xlu0 %v292, 96
  %v296 = vpop.permute.xlu0 %295
  %v298 = vmul.f32 %v293, %v296
  %v299 = vmul.f32 %v280, %v151
  %v300 = vadd.f32 %v298, %v299
  %s301 = scalar_lea.vmem %s1, 1
  %v302 = vld [vmem:[%s301] sm:$0x1]
  %v303 = vunpack.c.l.bf16 %v302
  %v304 = vadd.f32 %v303, %v255
  %v305 = vxor.u32 %v304, 2147483648
  %v306 = vmul.f32 %v305, 1.442695
  %v307 = vpow.pop %v306
  %v308 = vadd.f32 %v307, 1.0
  %v309 = vrcp.pop %v308
  %v310 = vmul.f32 %v308, %v309
  %v311 = vsub.f32 1.0, %v310
  %v312 = vmul.f32 %v309, %v311
  %v313 = vadd.f32 %v309, %v312
  %vm314 = vweird.f32 %v308
  %vm315 = vweird.f32 %v309
  %vm316 = vmor %vm314, %vm315
  %v317 = vsel %vm316, %v309, %v313
  %v318 = vand.u32 2147483647, %v308
  %vm319 = vcmp.eq.f32.partialorder %v318, 8.507059e+37
  %v320 = vand.u32 %v308, 2147483648
  %v321 = vor.u32 1.1754944e-38, %v320
  %v322 = vsel %vm319, %v321, %v317
  %v323 = vmul.f32 1.0, %v322
  %v324 = vadd.f32 %v255, %v177
  %326 = vrot.lane.b32.xlu0 %v324, 64
  %v327 = vpop.permute.xlu0 %326
  %v329 = vmul.f32 %v323, %v327
  %331 = vrot.lane.b32.xlu0 %v329, 64
  %v332 = vpop.permute.xlu0 %331
  %v334 = vadd.f32 %v303, %v332
  %v335 = vtanh.pop %v334
  %v336 = vsub.f32 1.0, %v323
  %338 = vrot.lane.b32.xlu0 %v335, 96
  %v339 = vpop.permute.xlu0 %338
  %v341 = vmul.f32 %v336, %v339
  %v342 = vmul.f32 %v323, %v202
  %v343 = vadd.f32 %v341, %v342
  %345 = vst [vmem:[#allocation1] ss:$4 sm:$0xff] %v300
  %v346 = vld.sshfl [vmem:[#allocation1] sm:$0xff pattern:$0x73625140]
  %347 = vrot.lane.b32.xlu0 %v346, 96
  %v348 = vpop.permute.xlu0 %347
  %s350 = scalar_lea.vmem %s4, 2
  %351 = vst.msk [vmem:[%s350] sm:$0x3] %vm209, %v348
  %353 = vst [vmem:[#allocation1] ss:$4 sm:$0xff] %v343
  %v354 = vld.sshfl [vmem:[#allocation1] sm:$0xff pattern:$0x73625140]
  %355 = vrot.lane.b32.xlu0 %v354, 96
  %v356 = vpop.permute.xlu0 %355
  %s358 = scalar_lea.vmem %s5, 2
  %359 = vst.msk [vmem:[%s358] sm:$0x3] %vm209, %v356
  %v360 = vpack.c.bf16 %v300, %v300
  %362 = vrot.lane.b32.xlu0 %v360, 96
  %v363 = vpop.permute.xlu0 %362
  %v365 = vsel %vm55, %v363, 0
  %367 = vmatpush.bf16.msra.mxu0 0
  %368 = vmatpush.bf16.msra.mxu0 0
  %369 = vmatpush.bf16.msra.mxu0 0
  %370 = vmatpush.bf16.msra.mxu0 0
  %371 = vmatpush.bf16.msra.mxu0 0
  %372 = vmatpush.bf16.msra.mxu0 0
  %373 = vmatpush.bf16.msra.mxu0 %v52
  %374 = vmatpush.bf16.msra.mxu0 %v51
  %375 = vmatmul.bf16.gmra.mxu0 %v365
  %v376 = vpop.f32.mrf.mxu0
  %v377 = vadd.f32 0.0, %v376
  %v378 = vpop.f32.mrf.mxu0
  %379 = vdwg.mxu0
  %v380 = vpack.c.bf16 %v343, %v343
  %382 = vrot.lane.b32.xlu0 %v380, 96
  %v383 = vpop.permute.xlu0 %382
  %v385 = vsel %vm55, %v383, 0
  %387 = vmatpush.bf16.msra.mxu0 0
  %388 = vmatpush.bf16.msra.mxu0 0
  %389 = vmatpush.bf16.msra.mxu0 0
  %390 = vmatpush.bf16.msra.mxu0 0
  %391 = vmatpush.bf16.msra.mxu0 0
  %392 = vmatpush.bf16.msra.mxu0 0
  %393 = vmatpush.bf16.msra.mxu0 %v82
  %394 = vmatpush.bf16.msra.mxu0 %v81
  %395 = vmatmul.bf16.gmra.mxu0 %v385
  %v396 = vpop.f32.mrf.mxu0
  %v397 = vadd.f32 0.0, %v396
  %v398 = vpop.f32.mrf.mxu0
  %399 = vdwg.mxu0
  %s400 = scalar_lea.vmem %s0, 2
  %v401 = vld [vmem:[%s400] sm:$0x1]
  %v402 = vunpack.c.l.bf16 %v401
  %v403 = vadd.f32 %v402, %v377
  %v404 = vxor.u32 %v403, 2147483648
  %v405 = vmul.f32 %v404, 1.442695
  %v406 = vpow.pop %v405
  %v407 = vadd.f32 %v406, 1.0
  %v408 = vrcp.pop %v407
  %v409 = vmul.f32 %v407, %v408
  %v410 = vsub.f32 1.0, %v409
  %v411 = vmul.f32 %v408, %v410
  %v412 = vadd.f32 %v408, %v411
  %vm413 = vweird.f32 %v407
  %vm414 = vweird.f32 %v408
  %vm415 = vmor %vm413, %vm414
  %v416 = vsel %vm415, %v408, %v412
  %v417 = vand.u32 2147483647, %v407
  %vm418 = vcmp.eq.f32.partialorder %v417, 8.507059e+37
  %v419 = vand.u32 %v407, 2147483648
  %v420 = vor.u32 1.1754944e-38, %v419
  %v421 = vsel %vm418, %v420, %v416
  %v422 = vmul.f32 1.0, %v421
  %v423 = vadd.f32 %v377, %v126
  %425 = vrot.lane.b32.xlu0 %v423, 64
  %v426 = vpop.permute.xlu0 %425
  %v428 = vmul.f32 %v422, %v426
  %430 = vrot.lane.b32.xlu0 %v428, 64
  %v431 = vpop.permute.xlu0 %430
  %v433 = vadd.f32 %v402, %v431
  %v434 = vtanh.pop %v433
  %v435 = vsub.f32 1.0, %v422
  %437 = vrot.lane.b32.xlu0 %v434, 96
  %v438 = vpop.permute.xlu0 %437
  %v440 = vmul.f32 %v435, %v438
  %v441 = vmul.f32 %v422, %v300
  %v442 = vadd.f32 %v440, %v441
  %s443 = scalar_lea.vmem %s1, 2
  %v444 = vld [vmem:[%s443] sm:$0x1]
  %v445 = vunpack.c.l.bf16 %v444
  %v446 = vadd.f32 %v445, %v397
  %v447 = vxor.u32 %v446, 2147483648
  %v448 = vmul.f32 %v447, 1.442695
  %v449 = vpow.pop %v448
  %v450 = vadd.f32 %v449, 1.0
  %v451 = vrcp.pop %v450
  %v452 = vmul.f32 %v450, %v451
  %v453 = vsub.f32 1.0, %v452
  %v454 = vmul.f32 %v451, %v453
  %v455 = vadd.f32 %v451, %v454
  %vm456 = vweird.f32 %v450
  %vm457 = vweird.f32 %v451
  %vm458 = vmor %vm456, %vm457
  %v459 = vsel %vm458, %v451, %v455
  %v460 = vand.u32 2147483647, %v450
  %vm461 = vcmp.eq.f32.partialorder %v460, 8.507059e+37
  %v462 = vand.u32 %v450, 2147483648
  %v463 = vor.u32 1.1754944e-38, %v462
  %v464 = vsel %vm461, %v463, %v459
  %v465 = vmul.f32 1.0, %v464
  %v466 = vadd.f32 %v397, %v177
  %468 = vrot.lane.b32.xlu0 %v466, 64
  %v469 = vpop.permute.xlu0 %468
  %v471 = vmul.f32 %v465, %v469
  %473 = vrot.lane.b32.xlu0 %v471, 64
  %v474 = vpop.permute.xlu0 %473
  %v476 = vadd.f32 %v445, %v474
  %v477 = vtanh.pop %v476
  %v478 = vsub.f32 1.0, %v465
  %480 = vrot.lane.b32.xlu0 %v477, 96
  %v481 = vpop.permute.xlu0 %480
  %v483 = vmul.f32 %v478, %v481
  %v484 = vmul.f32 %v465, %v343
  %v485 = vadd.f32 %v483, %v484
  %487 = vst [vmem:[#allocation1] ss:$4 sm:$0xff] %v442
  %v488 = vld.sshfl [vmem:[#allocation1] sm:$0xff pattern:$0x73625140]
  %489 = vrot.lane.b32.xlu0 %v488, 96
  %v490 = vpop.permute.xlu0 %489
  %s492 = scalar_lea.vmem %s4, 4
  %493 = vst.msk [vmem:[%s492] sm:$0x3] %vm209, %v490
  %495 = vst [vmem:[#allocation1] ss:$4 sm:$0xff] %v485
  %v496 = vld.sshfl [vmem:[#allocation1] sm:$0xff pattern:$0x73625140]
  %497 = vrot.lane.b32.xlu0 %v496, 96
  %v498 = vpop.permute.xlu0 %497
  %s500 = scalar_lea.vmem %s5, 4
  %501 = vst.msk [vmem:[%s500] sm:$0x3] %vm209, %v498
  %v502 = vpack.c.bf16 %v442, %v442
  %504 = vrot.lane.b32.xlu0 %v502, 96
  %v505 = vpop.permute.xlu0 %504
  %v507 = vsel %vm55, %v505, 0
  %509 = vmatpush.bf16.msra.mxu0 0
  %510 = vmatpush.bf16.msra.mxu0 0
  %511 = vmatpush.bf16.msra.mxu0 0
  %512 = vmatpush.bf16.msra.mxu0 0
  %513 = vmatpush.bf16.msra.mxu0 0
  %514 = vmatpush.bf16.msra.mxu0 0
  %515 = vmatpush.bf16.msra.mxu0 %v52
  %516 = vmatpush.bf16.msra.mxu0 %v51
  %517 = vmatmul.bf16.gmra.mxu0 %v507
  %v518 = vpop.f32.mrf.mxu0
  %v519 = vadd.f32 0.0, %v518
  %v520 = vpop.f32.mrf.mxu0
  %521 = vdwg.mxu0
  %v522 = vpack.c.bf16 %v485, %v485
  %524 = vrot.lane.b32.xlu0 %v522, 96
  %v525 = vpop.permute.xlu0 %524
  %v527 = vsel %vm55, %v525, 0
  %529 = vmatpush.bf16.msra.mxu0 0
  %530 = vmatpush.bf16.msra.mxu0 0
  %531 = vmatpush.bf16.msra.mxu0 0
  %532 = vmatpush.bf16.msra.mxu0 0
  %533 = vmatpush.bf16.msra.mxu0 0
  %534 = vmatpush.bf16.msra.mxu0 0
  %535 = vmatpush.bf16.msra.mxu0 %v82
  %536 = vmatpush.bf16.msra.mxu0 %v81
  %537 = vmatmul.bf16.gmra.mxu0 %v527
  %v538 = vpop.f32.mrf.mxu0
  %v539 = vadd.f32 0.0, %v538
  %v540 = vpop.f32.mrf.mxu0
  %541 = vdwg.mxu0
  %s542 = scalar_lea.vmem %s0, 3
  %v543 = vld [vmem:[%s542] sm:$0x1]
  %v544 = vunpack.c.l.bf16 %v543
  %v545 = vadd.f32 %v544, %v519
  %v546 = vxor.u32 %v545, 2147483648
  %v547 = vmul.f32 %v546, 1.442695
  %v548 = vpow.pop %v547
  %v549 = vadd.f32 %v548, 1.0
  %v550 = vrcp.pop %v549
  %v551 = vmul.f32 %v549, %v550
  %v552 = vsub.f32 1.0, %v551
  %v553 = vmul.f32 %v550, %v552
  %v554 = vadd.f32 %v550, %v553
  %vm555 = vweird.f32 %v549
  %vm556 = vweird.f32 %v550
  %vm557 = vmor %vm555, %vm556
  %v558 = vsel %vm557, %v550, %v554
  %v559 = vand.u32 2147483647, %v549
  %vm560 = vcmp.eq.f32.partialorder %v559, 8.507059e+37
  %v561 = vand.u32 %v549, 2147483648
  %v562 = vor.u32 1.1754944e-38, %v561
  %v563 = vsel %vm560, %v562, %v558
  %v564 = vmul.f32 1.0, %v563
  %v565 = vadd.f32 %v519, %v126
  %567 = vrot.lane.b32.xlu0 %v565, 64
  %v568 = vpop.permute.xlu0 %567
  %v570 = vmul.f32 %v564, %v568
  %572 = vrot.lane.b32.xlu0 %v570, 64
  %v573 = vpop.permute.xlu0 %572
  %v575 = vadd.f32 %v544, %v573
  %v576 = vtanh.pop %v575
  %v577 = vsub.f32 1.0, %v564
  %579 = vrot.lane.b32.xlu0 %v576, 96
  %v580 = vpop.permute.xlu0 %579
  %v582 = vmul.f32 %v577, %v580
  %v583 = vmul.f32 %v564, %v442
  %v584 = vadd.f32 %v582, %v583
  %s585 = scalar_lea.vmem %s1, 3
  %v586 = vld [vmem:[%s585] sm:$0x1]
  %v587 = vunpack.c.l.bf16 %v586
  %v588 = vadd.f32 %v587, %v539
  %v589 = vxor.u32 %v588, 2147483648
  %v590 = vmul.f32 %v589, 1.442695
  %v591 = vpow.pop %v590
  %v592 = vadd.f32 %v591, 1.0
  %v593 = vrcp.pop %v592
  %v594 = vmul.f32 %v592, %v593
  %v595 = vsub.f32 1.0, %v594
  %v596 = vmul.f32 %v593, %v595
  %v597 = vadd.f32 %v593, %v596
  %vm598 = vweird.f32 %v592
  %vm599 = vweird.f32 %v593
  %vm600 = vmor %vm598, %vm599
  %v601 = vsel %vm600, %v593, %v597
  %v602 = vand.u32 2147483647, %v592
  %vm603 = vcmp.eq.f32.partialorder %v602, 8.507059e+37
  %v604 = vand.u32 %v592, 2147483648
  %v605 = vor.u32 1.1754944e-38, %v604
  %v606 = vsel %vm603, %v605, %v601
  %v607 = vmul.f32 1.0, %v606
  %v608 = vadd.f32 %v539, %v177
  %610 = vrot.lane.b32.xlu0 %v608, 64
  %v611 = vpop.permute.xlu0 %610
  %v613 = vmul.f32 %v607, %v611
  %615 = vrot.lane.b32.xlu0 %v613, 64
  %v616 = vpop.permute.xlu0 %615
  %v618 = vadd.f32 %v587, %v616
  %v619 = vtanh.pop %v618
  %v620 = vsub.f32 1.0, %v607
  %622 = vrot.lane.b32.xlu0 %v619, 96
  %v623 = vpop.permute.xlu0 %622
  %v625 = vmul.f32 %v620, %v623
  %v626 = vmul.f32 %v607, %v485
  %v627 = vadd.f32 %v625, %v626
  %629 = vst [vmem:[#allocation1] ss:$4 sm:$0xff] %v584
  %v630 = vld.sshfl [vmem:[#allocation1] sm:$0xff pattern:$0x73625140]
  %631 = vrot.lane.b32.xlu0 %v630, 96
  %v632 = vpop.permute.xlu0 %631
  %s634 = scalar_lea.vmem %s4, 6
  %635 = vst.msk [vmem:[%s634] sm:$0x3] %vm209, %v632
  %637 = vst [vmem:[#allocation1] ss:$4 sm:$0xff] %v627
  %v638 = vld.sshfl [vmem:[#allocation1] sm:$0xff pattern:$0x73625140]
  %639 = vrot.lane.b32.xlu0 %v638, 96
  %v640 = vpop.permute.xlu0 %639
  %s642 = scalar_lea.vmem %s5, 6
  %643 = vst.msk [vmem:[%s642] sm:$0x3] %vm209, %v640
  %v644 = vpack.c.bf16 %v584, %v584
  %646 = vrot.lane.b32.xlu0 %v644, 96
  %v647 = vpop.permute.xlu0 %646
  %v649 = vsel %vm55, %v647, 0
  %651 = vmatpush.bf16.msra.mxu0 0
  %652 = vmatpush.bf16.msra.mxu0 0
  %653 = vmatpush.bf16.msra.mxu0 0
  %654 = vmatpush.bf16.msra.mxu0 0
  %655 = vmatpush.bf16.msra.mxu0 0
  %656 = vmatpush.bf16.msra.mxu0 0
  %657 = vmatpush.bf16.msra.mxu0 %v52
  %658 = vmatpush.bf16.msra.mxu0 %v51
  %659 = vmatmul.bf16.gmra.mxu0 %v649
  %v660 = vpop.f32.mrf.mxu0
  %v661 = vadd.f32 0.0, %v660
  %v662 = vpop.f32.mrf.mxu0
  %663 = vdwg.mxu0
  %v664 = vpack.c.bf16 %v627, %v627
  %666 = vrot.lane.b32.xlu0 %v664, 96
  %v667 = vpop.permute.xlu0 %666
  %v669 = vsel %vm55, %v667, 0
  %671 = vmatpush.bf16.msra.mxu0 0
  %672 = vmatpush.bf16.msra.mxu0 0
  %673 = vmatpush.bf16.msra.mxu0 0
  %674 = vmatpush.bf16.msra.mxu0 0
  %675 = vmatpush.bf16.msra.mxu0 0
  %676 = vmatpush.bf16.msra.mxu0 0
  %677 = vmatpush.bf16.msra.mxu0 %v82
  %678 = vmatpush.bf16.msra.mxu0 %v81
  %679 = vmatmul.bf16.gmra.mxu0 %v669
  %v680 = vpop.f32.mrf.mxu0
  %v681 = vadd.f32 0.0, %v680
  %v682 = vpop.f32.mrf.mxu0
  %683 = vdwg.mxu0
  %s684 = scalar_lea.vmem %s0, 4
  %v685 = vld [vmem:[%s684] sm:$0x1]
  %v686 = vunpack.c.l.bf16 %v685
  %v687 = vadd.f32 %v686, %v661
  %v688 = vxor.u32 %v687, 2147483648
  %v689 = vmul.f32 %v688, 1.442695
  %v690 = vpow.pop %v689
  %v691 = vadd.f32 %v690, 1.0
  %v692 = vrcp.pop %v691
  %v693 = vmul.f32 %v691, %v692
  %v694 = vsub.f32 1.0, %v693
  %v695 = vmul.f32 %v692, %v694
  %v696 = vadd.f32 %v692, %v695
  %vm697 = vweird.f32 %v691
  %vm698 = vweird.f32 %v692
  %vm699 = vmor %vm697, %vm698
  %v700 = vsel %vm699, %v692, %v696
  %v701 = vand.u32 2147483647, %v691
  %vm702 = vcmp.eq.f32.partialorder %v701, 8.507059e+37
  %v703 = vand.u32 %v691, 2147483648
  %v704 = vor.u32 1.1754944e-38, %v703
  %v705 = vsel %vm702, %v704, %v700
  %v706 = vmul.f32 1.0, %v705
  %v707 = vadd.f32 %v661, %v126
  %709 = vrot.lane.b32.xlu0 %v707, 64
  %v710 = vpop.permute.xlu0 %709
  %v712 = vmul.f32 %v706, %v710
  %714 = vrot.lane.b32.xlu0 %v712, 64
  %v715 = vpop.permute.xlu0 %714
  %v717 = vadd.f32 %v686, %v715
  %v718 = vtanh.pop %v717
  %v719 = vsub.f32 1.0, %v706
  %721 = vrot.lane.b32.xlu0 %v718, 96
  %v722 = vpop.permute.xlu0 %721
  %v724 = vmul.f32 %v719, %v722
  %v725 = vmul.f32 %v706, %v584
  %v726 = vadd.f32 %v724, %v725
  %s727 = scalar_lea.vmem %s1, 4
  %v728 = vld [vmem:[%s727] sm:$0x1]
  %v729 = vunpack.c.l.bf16 %v728
  %v730 = vadd.f32 %v729, %v681
  %v731 = vxor.u32 %v730, 2147483648
  %v732 = vmul.f32 %v731, 1.442695
  %v733 = vpow.pop %v732
  %v734 = vadd.f32 %v733, 1.0
  %v735 = vrcp.pop %v734
  %v736 = vmul.f32 %v734, %v735
  %v737 = vsub.f32 1.0, %v736
  %v738 = vmul.f32 %v735, %v737
  %v739 = vadd.f32 %v735, %v738
  %vm740 = vweird.f32 %v734
  %vm741 = vweird.f32 %v735
  %vm742 = vmor %vm740, %vm741
  %v743 = vsel %vm742, %v735, %v739
  %v744 = vand.u32 2147483647, %v734
  %vm745 = vcmp.eq.f32.partialorder %v744, 8.507059e+37
  %v746 = vand.u32 %v734, 2147483648
  %v747 = vor.u32 1.1754944e-38, %v746
  %v748 = vsel %vm745, %v747, %v743
  %v749 = vmul.f32 1.0, %v748
  %v750 = vadd.f32 %v681, %v177
  %752 = vrot.lane.b32.xlu0 %v750, 64
  %v753 = vpop.permute.xlu0 %752
  %v755 = vmul.f32 %v749, %v753
  %757 = vrot.lane.b32.xlu0 %v755, 64
  %v758 = vpop.permute.xlu0 %757
  %v760 = vadd.f32 %v729, %v758
  %v761 = vtanh.pop %v760
  %v762 = vsub.f32 1.0, %v749
  %764 = vrot.lane.b32.xlu0 %v761, 96
  %v765 = vpop.permute.xlu0 %764
  %v767 = vmul.f32 %v762, %v765
  %v768 = vmul.f32 %v749, %v627
  %v769 = vadd.f32 %v767, %v768
  %771 = vst [vmem:[#allocation1] ss:$4 sm:$0xff] %v726
  %v772 = vld.sshfl [vmem:[#allocation1] sm:$0xff pattern:$0x73625140]
  %773 = vrot.lane.b32.xlu0 %v772, 96
  %v774 = vpop.permute.xlu0 %773
  %s776 = scalar_lea.vmem %s4, 8
  %777 = vst.msk [vmem:[%s776] sm:$0x3] %vm209, %v774
  %779 = vst [vmem:[#allocation1] ss:$4 sm:$0xff] %v769
  %v780 = vld.sshfl [vmem:[#allocation1] sm:$0xff pattern:$0x73625140]
  %781 = vrot.lane.b32.xlu0 %v780, 96
  %v782 = vpop.permute.xlu0 %781
  %s784 = scalar_lea.vmem %s5, 8
  %785 = vst.msk [vmem:[%s784] sm:$0x3] %vm209, %v782
  %v786 = vpack.c.bf16 %v726, %v726
  %788 = vrot.lane.b32.xlu0 %v786, 96
  %v789 = vpop.permute.xlu0 %788
  %v791 = vsel %vm55, %v789, 0
  %793 = vmatpush.bf16.msra.mxu0 0
  %794 = vmatpush.bf16.msra.mxu0 0
  %795 = vmatpush.bf16.msra.mxu0 0
  %796 = vmatpush.bf16.msra.mxu0 0
  %797 = vmatpush.bf16.msra.mxu0 0
  %798 = vmatpush.bf16.msra.mxu0 0
  %799 = vmatpush.bf16.msra.mxu0 %v52
  %800 = vmatpush.bf16.msra.mxu0 %v51
  %801 = vmatmul.bf16.gmra.mxu0 %v791
  %v802 = vpop.f32.mrf.mxu0
  %v803 = vadd.f32 0.0, %v802
  %v804 = vpop.f32.mrf.mxu0
  %805 = vdwg.mxu0
  %v806 = vpack.c.bf16 %v769, %v769
  %808 = vrot.lane.b32.xlu0 %v806, 96
  %v809 = vpop.permute.xlu0 %808
  %v811 = vsel %vm55, %v809, 0
  %813 = vmatpush.bf16.msra.mxu0 0
  %814 = vmatpush.bf16.msra.mxu0 0
  %815 = vmatpush.bf16.msra.mxu0 0
  %816 = vmatpush.bf16.msra.mxu0 0
  %817 = vmatpush.bf16.msra.mxu0 0
  %818 = vmatpush.bf16.msra.mxu0 0
  %819 = vmatpush.bf16.msra.mxu0 %v82
  %820 = vmatpush.bf16.msra.mxu0 %v81
  %821 = vmatmul.bf16.gmra.mxu0 %v811
  %v822 = vpop.f32.mrf.mxu0
  %v823 = vadd.f32 0.0, %v822
  %v824 = vpop.f32.mrf.mxu0
  %825 = vdwg.mxu0
  %s826 = scalar_lea.vmem %s0, 5
  %v827 = vld [vmem:[%s826] sm:$0x1]
  %v828 = vunpack.c.l.bf16 %v827
  %v829 = vadd.f32 %v828, %v803
  %v830 = vxor.u32 %v829, 2147483648
  %v831 = vmul.f32 %v830, 1.442695
  %v832 = vpow.pop %v831
  %v833 = vadd.f32 %v832, 1.0
  %v834 = vrcp.pop %v833
  %v835 = vmul.f32 %v833, %v834
  %v836 = vsub.f32 1.0, %v835
  %v837 = vmul.f32 %v834, %v836
  %v838 = vadd.f32 %v834, %v837
  %vm839 = vweird.f32 %v833
  %vm840 = vweird.f32 %v834
  %vm841 = vmor %vm839, %vm840
  %v842 = vsel %vm841, %v834, %v838
  %v843 = vand.u32 2147483647, %v833
  %vm844 = vcmp.eq.f32.partialorder %v843, 8.507059e+37
  %v845 = vand.u32 %v833, 2147483648
  %v846 = vor.u32 1.1754944e-38, %v845
  %v847 = vsel %vm844, %v846, %v842
  %v848 = vmul.f32 1.0, %v847
  %v849 = vadd.f32 %v803, %v126
  %851 = vrot.lane.b32.xlu0 %v849, 64
  %v852 = vpop.permute.xlu0 %851
  %v854 = vmul.f32 %v848, %v852
  %856 = vrot.lane.b32.xlu0 %v854, 64
  %v857 = vpop.permute.xlu0 %856
  %v859 = vadd.f32 %v828, %v857
  %v860 = vtanh.pop %v859
  %v861 = vsub.f32 1.0, %v848
  %863 = vrot.lane.b32.xlu0 %v860, 96
  %v864 = vpop.permute.xlu0 %863
  %v866 = vmul.f32 %v861, %v864
  %v867 = vmul.f32 %v848, %v726
  %v868 = vadd.f32 %v866, %v867
  %s869 = scalar_lea.vmem %s1, 5
  %v870 = vld [vmem:[%s869] sm:$0x1]
  %v871 = vunpack.c.l.bf16 %v870
  %v872 = vadd.f32 %v871, %v823
  %v873 = vxor.u32 %v872, 2147483648
  %v874 = vmul.f32 %v873, 1.442695
  %v875 = vpow.pop %v874
  %v876 = vadd.f32 %v875, 1.0
  %v877 = vrcp.pop %v876
  %v878 = vmul.f32 %v876, %v877
  %v879 = vsub.f32 1.0, %v878
  %v880 = vmul.f32 %v877, %v879
  %v881 = vadd.f32 %v877, %v880
  %vm882 = vweird.f32 %v876
  %vm883 = vweird.f32 %v877
  %vm884 = vmor %vm882, %vm883
  %v885 = vsel %vm884, %v877, %v881
  %v886 = vand.u32 2147483647, %v876
  %vm887 = vcmp.eq.f32.partialorder %v886, 8.507059e+37
  %v888 = vand.u32 %v876, 2147483648
  %v889 = vor.u32 1.1754944e-38, %v888
  %v890 = vsel %vm887, %v889, %v885
  %v891 = vmul.f32 1.0, %v890
  %v892 = vadd.f32 %v823, %v177
  %894 = vrot.lane.b32.xlu0 %v892, 64
  %v895 = vpop.permute.xlu0 %894
  %v897 = vmul.f32 %v891, %v895
  %899 = vrot.lane.b32.xlu0 %v897, 64
  %v900 = vpop.permute.xlu0 %899
  %v902 = vadd.f32 %v871, %v900
  %v903 = vtanh.pop %v902
  %v904 = vsub.f32 1.0, %v891
  %906 = vrot.lane.b32.xlu0 %v903, 96
  %v907 = vpop.permute.xlu0 %906
  %v909 = vmul.f32 %v904, %v907
  %v910 = vmul.f32 %v891, %v769
  %v911 = vadd.f32 %v909, %v910
  %913 = vst [vmem:[#allocation1] ss:$4 sm:$0xff] %v868
  %v914 = vld.sshfl [vmem:[#allocation1] sm:$0xff pattern:$0x73625140]
  %915 = vrot.lane.b32.xlu0 %v914, 96
  %v916 = vpop.permute.xlu0 %915
  %s918 = scalar_lea.vmem %s4, 10
  %919 = vst.msk [vmem:[%s918] sm:$0x3] %vm209, %v916
  %921 = vst [vmem:[#allocation1] ss:$4 sm:$0xff] %v911
  %v922 = vld.sshfl [vmem:[#allocation1] sm:$0xff pattern:$0x73625140]
  %923 = vrot.lane.b32.xlu0 %v922, 96
  %v924 = vpop.permute.xlu0 %923
  %s926 = scalar_lea.vmem %s5, 10
  %927 = vst.msk [vmem:[%s926] sm:$0x3] %vm209, %v924
  %v928 = vpack.c.bf16 %v868, %v868
  %930 = vrot.lane.b32.xlu0 %v928, 96
  %v931 = vpop.permute.xlu0 %930
  %v933 = vsel %vm55, %v931, 0
  %935 = vmatpush.bf16.msra.mxu0 0
  %936 = vmatpush.bf16.msra.mxu0 0
  %937 = vmatpush.bf16.msra.mxu0 0
  %938 = vmatpush.bf16.msra.mxu0 0
  %939 = vmatpush.bf16.msra.mxu0 0
  %940 = vmatpush.bf16.msra.mxu0 0
  %941 = vmatpush.bf16.msra.mxu0 %v52
  %942 = vmatpush.bf16.msra.mxu0 %v51
  %943 = vmatmul.bf16.gmra.mxu0 %v933
  %v944 = vpop.f32.mrf.mxu0
  %v945 = vadd.f32 0.0, %v944
  %v946 = vpop.f32.mrf.mxu0
  %947 = vdwg.mxu0
  %v948 = vpack.c.bf16 %v911, %v911
  %950 = vrot.lane.b32.xlu0 %v948, 96
  %v951 = vpop.permute.xlu0 %950
  %v953 = vsel %vm55, %v951, 0
  %955 = vmatpush.bf16.msra.mxu0 0
  %956 = vmatpush.bf16.msra.mxu0 0
  %957 = vmatpush.bf16.msra.mxu0 0
  %958 = vmatpush.bf16.msra.mxu0 0
  %959 = vmatpush.bf16.msra.mxu0 0
  %960 = vmatpush.bf16.msra.mxu0 0
  %961 = vmatpush.bf16.msra.mxu0 %v82
  %962 = vmatpush.bf16.msra.mxu0 %v81
  %963 = vmatmul.bf16.gmra.mxu0 %v953
  %v964 = vpop.f32.mrf.mxu0
  %v965 = vadd.f32 0.0, %v964
  %v966 = vpop.f32.mrf.mxu0
  %967 = vdwg.mxu0
  %s968 = scalar_lea.vmem %s0, 6
  %v969 = vld [vmem:[%s968] sm:$0x1]
  %v970 = vunpack.c.l.bf16 %v969
  %v971 = vadd.f32 %v970, %v945
  %v972 = vxor.u32 %v971, 2147483648
  %v973 = vmul.f32 %v972, 1.442695
  %v974 = vpow.pop %v973
  %v975 = vadd.f32 %v974, 1.0
  %v976 = vrcp.pop %v975
  %v977 = vmul.f32 %v975, %v976
  %v978 = vsub.f32 1.0, %v977
  %v979 = vmul.f32 %v976, %v978
  %v980 = vadd.f32 %v976, %v979
  %vm981 = vweird.f32 %v975
  %vm982 = vweird.f32 %v976
  %vm983 = vmor %vm981, %vm982
  %v984 = vsel %vm983, %v976, %v980
  %v985 = vand.u32 2147483647, %v975
  %vm986 = vcmp.eq.f32.partialorder %v985, 8.507059e+37
  %v987 = vand.u32 %v975, 2147483648
  %v988 = vor.u32 1.1754944e-38, %v987
  %v989 = vsel %vm986, %v988, %v984
  %v990 = vmul.f32 1.0, %v989
  %v991 = vadd.f32 %v945, %v126
  %993 = vrot.lane.b32.xlu0 %v991, 64
  %v994 = vpop.permute.xlu0 %993
  %v996 = vmul.f32 %v990, %v994
  %998 = vrot.lane.b32.xlu0 %v996, 64
  %v999 = vpop.permute.xlu0 %998
  %v1001 = vadd.f32 %v970, %v999
  %v1002 = vtanh.pop %v1001
  %v1003 = vsub.f32 1.0, %v990
  %1005 = vrot.lane.b32.xlu0 %v1002, 96
  %v1006 = vpop.permute.xlu0 %1005
  %v1008 = vmul.f32 %v1003, %v1006
  %v1009 = vmul.f32 %v990, %v868
  %v1010 = vadd.f32 %v1008, %v1009
  %s1011 = scalar_lea.vmem %s1, 6
  %v1012 = vld [vmem:[%s1011] sm:$0x1]
  %v1013 = vunpack.c.l.bf16 %v1012
  %v1014 = vadd.f32 %v1013, %v965
  %v1015 = vxor.u32 %v1014, 2147483648
  %v1016 = vmul.f32 %v1015, 1.442695
  %v1017 = vpow.pop %v1016
  %v1018 = vadd.f32 %v1017, 1.0
  %v1019 = vrcp.pop %v1018
  %v1020 = vmul.f32 %v1018, %v1019
  %v1021 = vsub.f32 1.0, %v1020
  %v1022 = vmul.f32 %v1019, %v1021
  %v1023 = vadd.f32 %v1019, %v1022
  %vm1024 = vweird.f32 %v1018
  %vm1025 = vweird.f32 %v1019
  %vm1026 = vmor %vm1024, %vm1025
  %v1027 = vsel %vm1026, %v1019, %v1023
  %v1028 = vand.u32 2147483647, %v1018
  %vm1029 = vcmp.eq.f32.partialorder %v1028, 8.507059e+37
  %v1030 = vand.u32 %v1018, 2147483648
  %v1031 = vor.u32 1.1754944e-38, %v1030
  %v1032 = vsel %vm1029, %v1031, %v1027
  %v1033 = vmul.f32 1.0, %v1032
  %v1034 = vadd.f32 %v965, %v177
  %1036 = vrot.lane.b32.xlu0 %v1034, 64
  %v1037 = vpop.permute.xlu0 %1036
  %v1039 = vmul.f32 %v1033, %v1037
  %1041 = vrot.lane.b32.xlu0 %v1039, 64
  %v1042 = vpop.permute.xlu0 %1041
  %v1044 = vadd.f32 %v1013, %v1042
  %v1045 = vtanh.pop %v1044
  %v1046 = vsub.f32 1.0, %v1033
  %1048 = vrot.lane.b32.xlu0 %v1045, 96
  %v1049 = vpop.permute.xlu0 %1048
  %v1051 = vmul.f32 %v1046, %v1049
  %v1052 = vmul.f32 %v1033, %v911
  %v1053 = vadd.f32 %v1051, %v1052
  %1055 = vst [vmem:[#allocation1] ss:$4 sm:$0xff] %v1010
  %v1056 = vld.sshfl [vmem:[#allocation1] sm:$0xff pattern:$0x73625140]
  %1057 = vrot.lane.b32.xlu0 %v1056, 96
  %v1058 = vpop.permute.xlu0 %1057
  %s1060 = scalar_lea.vmem %s4, 12
  %1061 = vst.msk [vmem:[%s1060] sm:$0x3] %vm209, %v1058
  %1063 = vst [vmem:[#allocation1] ss:$4 sm:$0xff] %v1053
  %v1064 = vld.sshfl [vmem:[#allocation1] sm:$0xff pattern:$0x73625140]
  %1065 = vrot.lane.b32.xlu0 %v1064, 96
  %v1066 = vpop.permute.xlu0 %1065
  %s1068 = scalar_lea.vmem %s5, 12
  %1069 = vst.msk [vmem:[%s1068] sm:$0x3] %vm209, %v1066
  %v1070 = vpack.c.bf16 %v1010, %v1010
  %1072 = vrot.lane.b32.xlu0 %v1070, 96
  %v1073 = vpop.permute.xlu0 %1072
  %v1075 = vsel %vm55, %v1073, 0
  %1077 = vmatpush.bf16.msra.mxu0 0
  %1078 = vmatpush.bf16.msra.mxu0 0
  %1079 = vmatpush.bf16.msra.mxu0 0
  %1080 = vmatpush.bf16.msra.mxu0 0
  %1081 = vmatpush.bf16.msra.mxu0 0
  %1082 = vmatpush.bf16.msra.mxu0 0
  %1083 = vmatpush.bf16.msra.mxu0 %v52
  %1084 = vmatpush.bf16.msra.mxu0 %v51
  %1085 = vmatmul.bf16.gmra.mxu0 %v1075
  %v1086 = vpop.f32.mrf.mxu0
  %v1087 = vadd.f32 0.0, %v1086
  %v1088 = vpop.f32.mrf.mxu0
  %1089 = vdwg.mxu0
  %v1090 = vpack.c.bf16 %v1053, %v1053
  %1092 = vrot.lane.b32.xlu0 %v1090, 96
  %v1093 = vpop.permute.xlu0 %1092
  %v1095 = vsel %vm55, %v1093, 0
  %1097 = vmatpush.bf16.msra.mxu0 0
  %1098 = vmatpush.bf16.msra.mxu0 0
  %1099 = vmatpush.bf16.msra.mxu0 0
  %1100 = vmatpush.bf16.msra.mxu0 0
  %1101 = vmatpush.bf16.msra.mxu0 0
  %1102 = vmatpush.bf16.msra.mxu0 0
  %1103 = vmatpush.bf16.msra.mxu0 %v82
  %1104 = vmatpush.bf16.msra.mxu0 %v81
  %1105 = vmatmul.bf16.gmra.mxu0 %v1095
  %v1106 = vpop.f32.mrf.mxu0
  %v1107 = vadd.f32 0.0, %v1106
  %v1108 = vpop.f32.mrf.mxu0
  %1109 = vdwg.mxu0
  %s1110 = scalar_lea.vmem %s0, 7
  %v1111 = vld [vmem:[%s1110] sm:$0x1]
  %v1112 = vunpack.c.l.bf16 %v1111
  %v1113 = vadd.f32 %v1112, %v1087
  %v1114 = vxor.u32 %v1113, 2147483648
  %v1115 = vmul.f32 %v1114, 1.442695
  %v1116 = vpow.pop %v1115
  %v1117 = vadd.f32 %v1116, 1.0
  %v1118 = vrcp.pop %v1117
  %v1119 = vmul.f32 %v1117, %v1118
  %v1120 = vsub.f32 1.0, %v1119
  %v1121 = vmul.f32 %v1118, %v1120
  %v1122 = vadd.f32 %v1118, %v1121
  %vm1123 = vweird.f32 %v1117
  %vm1124 = vweird.f32 %v1118
  %vm1125 = vmor %vm1123, %vm1124
  %v1126 = vsel %vm1125, %v1118, %v1122
  %v1127 = vand.u32 2147483647, %v1117
  %vm1128 = vcmp.eq.f32.partialorder %v1127, 8.507059e+37
  %v1129 = vand.u32 %v1117, 2147483648
  %v1130 = vor.u32 1.1754944e-38, %v1129
  %v1131 = vsel %vm1128, %v1130, %v1126
  %v1132 = vmul.f32 1.0, %v1131
  %v1133 = vadd.f32 %v1087, %v126
  %1135 = vrot.lane.b32.xlu0 %v1133, 64
  %v1136 = vpop.permute.xlu0 %1135
  %v1138 = vmul.f32 %v1132, %v1136
  %1140 = vrot.lane.b32.xlu0 %v1138, 64
  %v1141 = vpop.permute.xlu0 %1140
  %v1143 = vadd.f32 %v1112, %v1141
  %v1144 = vtanh.pop %v1143
  %v1145 = vsub.f32 1.0, %v1132
  %1147 = vrot.lane.b32.xlu0 %v1144, 96
  %v1148 = vpop.permute.xlu0 %1147
  %v1150 = vmul.f32 %v1145, %v1148
  %v1151 = vmul.f32 %v1132, %v1010
  %v1152 = vadd.f32 %v1150, %v1151
  %s1153 = scalar_lea.vmem %s1, 7
  %v1154 = vld [vmem:[%s1153] sm:$0x1]
  %v1155 = vunpack.c.l.bf16 %v1154
  %v1156 = vadd.f32 %v1155, %v1107
  %v1157 = vxor.u32 %v1156, 2147483648
  %v1158 = vmul.f32 %v1157, 1.442695
  %v1159 = vpow.pop %v1158
  %v1160 = vadd.f32 %v1159, 1.0
  %v1161 = vrcp.pop %v1160
  %v1162 = vmul.f32 %v1160, %v1161
  %v1163 = vsub.f32 1.0, %v1162
  %v1164 = vmul.f32 %v1161, %v1163
  %v1165 = vadd.f32 %v1161, %v1164
  %vm1166 = vweird.f32 %v1160
  %vm1167 = vweird.f32 %v1161
  %vm1168 = vmor %vm1166, %vm1167
  %v1169 = vsel %vm1168, %v1161, %v1165
  %v1170 = vand.u32 2147483647, %v1160
  %vm1171 = vcmp.eq.f32.partialorder %v1170, 8.507059e+37
  %v1172 = vand.u32 %v1160, 2147483648
  %v1173 = vor.u32 1.1754944e-38, %v1172
  %v1174 = vsel %vm1171, %v1173, %v1169
  %v1175 = vmul.f32 1.0, %v1174
  %v1176 = vadd.f32 %v1107, %v177
  %1178 = vrot.lane.b32.xlu0 %v1176, 64
  %v1179 = vpop.permute.xlu0 %1178
  %v1181 = vmul.f32 %v1175, %v1179
  %1183 = vrot.lane.b32.xlu0 %v1181, 64
  %v1184 = vpop.permute.xlu0 %1183
  %v1186 = vadd.f32 %v1155, %v1184
  %v1187 = vtanh.pop %v1186
  %v1188 = vsub.f32 1.0, %v1175
  %1190 = vrot.lane.b32.xlu0 %v1187, 96
  %v1191 = vpop.permute.xlu0 %1190
  %v1193 = vmul.f32 %v1188, %v1191
  %v1194 = vmul.f32 %v1175, %v1053
  %v1195 = vadd.f32 %v1193, %v1194
  %1197 = vst [vmem:[#allocation1] ss:$4 sm:$0xff] %v1152
  %v1198 = vld.sshfl [vmem:[#allocation1] sm:$0xff pattern:$0x73625140]
  %1199 = vrot.lane.b32.xlu0 %v1198, 96
  %v1200 = vpop.permute.xlu0 %1199
  %s1202 = scalar_lea.vmem %s4, 14
  %1203 = vst.msk [vmem:[%s1202] sm:$0x3] %vm209, %v1200
  %1205 = vst [vmem:[#allocation1] ss:$4 sm:$0xff] %v1195
  %v1206 = vld.sshfl [vmem:[#allocation1] sm:$0xff pattern:$0x73625140]
  %1207 = vrot.lane.b32.xlu0 %v1206, 96
  %v1208 = vpop.permute.xlu0 %1207
  %s1210 = scalar_lea.vmem %s5, 14
  %1211 = vst.msk [vmem:[%s1210] sm:$0x3] %vm209, %v1208
  %1212 = vst [vmem:[#allocation1] ss:$4 sm:$0xff] %v1152
  %v1213 = vld.sshfl [vmem:[#allocation1] sm:$0xff pattern:$0x73625140]
  %1214 = vrot.lane.b32.xlu0 %v1213, 96
  %v1215 = vpop.permute.xlu0 %1214
  %1217 = vst.msk [vmem:[#allocation2] sm:$0x3] %vm209, %v1215
  %1218 = vst [vmem:[#allocation1] ss:$4 sm:$0xff] %v1195
  %v1219 = vld.sshfl [vmem:[#allocation1] sm:$0xff pattern:$0x73625140]
  %1220 = vrot.lane.b32.xlu0 %v1219, 96
  %v1221 = vpop.permute.xlu0 %1220
  %1223 = vst.msk [vmem:[%s40] sm:$0x3] %vm209, %v1221
  // Predicated region
  $region22: #{encoder_rnn_forward.1} parent=0 // pred_check
    _
  $region23: #{encoder_rnn_forward.1} parent=0 // pred_check_branch
    %1225 = sbr.rel (0) target = $region25
  $region24: #{encoder_rnn_forward.1} parent=0 // pred_region
    _
  $region25: #{encoder_rnn_forward.1} parent=0 // pred_fallthru
    _
  // Predicated region
  $region26: #{encoder_rnn_forward.1} parent=0 // pred_check
    _
  $region27: #{encoder_rnn_forward.1} parent=0 // pred_check_branch
    %1227 = sbr.rel (0) target = $region29
  $region28: #{encoder_rnn_forward.1} parent=0 // pred_region
    _
  $region29: #{encoder_rnn_forward.1} parent=0 // pred_fallthru
    _
  // Predicated region
  $region30: #{encoder_rnn_forward.1} parent=0 // pred_check
    _
  $region31: #{encoder_rnn_forward.1} parent=0 // pred_check_branch
    %1229 = sbr.rel (0) target = $region33
  $region32: #{encoder_rnn_forward.1} parent=0 // pred_region
    _
  $region33: #{encoder_rnn_forward.1} parent=0 // pred_fallthru
    _
  // Predicated region
  $region34: #{encoder_rnn_forward.1} parent=0 // pred_check
    _
  $region35: #{encoder_rnn_forward.1} parent=0 // pred_check_branch
    %1231 = sbr.rel (0) target = $region37
  $region36: #{encoder_rnn_forward.1} parent=0 // pred_region
    _
  $region37: #{encoder_rnn_forward.1} parent=0 // pred_fallthru
    _

</llo_original>
